<compile_context>
chip_gen: v5e
topology: v5e:2x2
jax: 0.10.0
libtpu: 0.0.40
codegen_flags: <defaults>
</compile_context>

<pallas_src>
import jax
import jax.numpy as jnp
from jax.experimental import pallas as pl
from jax.experimental.pallas import tpu as pltpu


def _mlp_kernel(x1_ref, x2_ref, w1a_ref, w1b_ref, b1_ref,
                w2_ref, b2_ref, w3_ref, b3_ref, o_ref):
    # Cast activations per block in VMEM (inputs arrive as f32; no extra
    # wrapper-side cast pass through HBM).
    x1 = x1_ref[...].astype(jnp.bfloat16)
    x2 = x2_ref[...].astype(jnp.bfloat16)

    # fc1, split-K over the (virtually concatenated) input; f32 accumulation.
    h1 = jnp.dot(x1, w1a_ref[...], preferred_element_type=jnp.float32)
    h1 = h1 + jnp.dot(x2, w1b_ref[...], preferred_element_type=jnp.float32)
    h1 = jnp.maximum(h1 + b1_ref[...], 0.0)                      # [tm, Hp] f32

    # fc2 + relu (bf16 to the MXU, f32 accumulate).
    h2 = jnp.dot(h1.astype(jnp.bfloat16), w2_ref[...],
                 preferred_element_type=jnp.float32)
    h2 = jnp.maximum(h2 + b2_ref[...], 0.0)                      # [tm, Hp] f32

    # fc3 (lane-dense [tm, Dout] store, f32 output).
    y = jnp.dot(h2.astype(jnp.bfloat16), w3_ref[...],
                preferred_element_type=jnp.float32)
    o_ref[...] = (y + b3_ref[...]).astype(o_ref.dtype)


def prepare_params(params, chw):
    """One-time parameter prep (do it once, outside the per-step call):
      * split w1 along its input dim so the torch.cat is folded into the
        kernel (h1 = x1 @ w1a + x2 @ w1b + b1),
      * zero-pad the hidden dim to a multiple of 128 (exact math; gives
        full-lane h1/h2 vregs and a full-width MXU contraction for fc2/fc3),
      * cast weights to bf16 (MXU-native, halves weight DMA), biases stay f32.
    """
    w1, b1, w2, b2, w3, b3 = params
    hid = w1.shape[1]
    dout = w3.shape[1]
    hid_p = ((hid + 127) // 128) * 128

    def pad2(a, rows, cols):
        return jnp.pad(a, ((0, rows - a.shape[0]), (0, cols - a.shape[1])))

    w1a = pad2(w1[:chw], chw, hid_p).astype(jnp.bfloat16)
    w1b = pad2(w1[chw:], chw, hid_p).astype(jnp.bfloat16)
    b1p = pad2(b1.reshape(1, -1), 1, hid_p).astype(jnp.float32)
    w2p = pad2(w2, hid_p, hid_p).astype(jnp.bfloat16)
    b2p = pad2(b2.reshape(1, -1), 1, hid_p).astype(jnp.float32)
    w3p = pad2(w3, hid_p, dout).astype(jnp.bfloat16)
    b3p = b3.reshape(1, -1).astype(jnp.float32)
    return (w1a, w1b, b1p, w2p, b2p, w3p, b3p)


def _choose_tm(B):
    """Batch tile: big (amortises ~0.35us/step grid overhead), multiple of 8,
    and >= 2 grid steps whenever B >= 16 so the 'parallel' axis can shard
    across v7x's two TensorCores."""
    if B <= 8:
        return B
    if B > 2048:
        return 1024
    half = (B + 1) // 2
    return min(B, ((half + 7) // 8) * 8)


def _vmem_footprint(tm, chw, hid, dout, in_itemsize):
    act = 2 * 2 * tm * chw * in_itemsize                 # x1 + x2, double-buffered
    out = 2 * tm * dout * 4                              # f32 output, double-buffered
    wts = 2 * ((2 * chw * hid + hid * hid + hid * dout) * 2   # bf16 weights
               + (2 * hid + dout) * 4)                   # f32 biases
    return act + out + wts


def to_mlp_forward(img1, img2, prepared_params, img_channels, img_height, img_width):
    """Forward pass matching to_MLP.forward (f32 output, NCHW)."""
    B = img1.shape[0]
    chw = img_channels * img_height * img_width
    # No dtype cast here: keep inputs f32 in HBM, cast per block in-kernel.
    x1 = img1.reshape(B, chw)
    x2 = img2.reshape(B, chw)

    w1a, w1b, b1, w2, b2, w3, b3 = prepared_params
    hid = w1a.shape[1]
    dout = w3.shape[1]
    if dout != chw:
        raise ValueError(
            f"output_dim ({dout}) must equal C*H*W ({chw}) for the NCHW reshape")

    in_itemsize = jnp.dtype(x1.dtype).itemsize
    tm = _choose_tm(B)
    # Keep the footprint comfortably inside v5e's scoped / v7x's physical VMEM.
    while tm > 8 and _vmem_footprint(tm, chw, hid, dout, in_itemsize) > (40 << 20):
        tm = max(8, ((tm // 2 + 7) // 8) * 8)
    grid = (pl.cdiv(B, tm),)

    vmem_limit = _vmem_footprint(tm, chw, hid, dout, in_itemsize) + (4 << 20)
    vmem_limit = int(min(max(vmem_limit, 16 << 20), 48 << 20))

    row_spec = lambda: pl.BlockSpec((tm, chw), lambda i: (i, 0))
    resident = lambda shape: pl.BlockSpec(shape, lambda i: (0, 0))

    out = pl.pallas_call(
        _mlp_kernel,
        out_shape=jax.ShapeDtypeStruct((B, dout), jnp.float32),
        grid=grid,
        in_specs=[
            row_spec(), row_spec(),
            resident((chw, hid)), resident((chw, hid)), resident((1, hid)),
            resident((hid, hid)), resident((1, hid)),
            resident((hid, dout)), resident((1, dout)),
        ],
        out_specs=pl.BlockSpec((tm, dout), lambda i: (i, 0)),
        compiler_params=pltpu.CompilerParams(
            dimension_semantics=("parallel",),
            vmem_limit_bytes=vmem_limit),
    )(x1, x2, w1a, w1b, b1, w2, b2, w3, b3)

    return out.reshape(B, img_channels, img_height, img_width)


def init_params(key, img_channels, img_height, img_width, hidden_dim, output_dim):
    """Deterministic synthetic parameters with the same shapes as the PyTorch
    module (stored transposed: [in, out]), f32 like nn.Linear."""
    input_dim = img_channels * img_height * img_width * 2
    ks = jax.random.split(key, 6)

    def lin(kw, kb, fan_in, fan_out):
        bound = 1.0 / jnp.sqrt(fan_in)
        w = jax.random.uniform(kw, (fan_in, fan_out), jnp.float32, -bound, bound)
        b = jax.random.uniform(kb, (1, fan_out), jnp.float32, -bound, bound)
        return w, b

    w1, b1 = lin(ks[0], ks[1], input_dim, hidden_dim)
    w2, b2 = lin(ks[2], ks[3], hidden_dim, hidden_dim)
    w3, b3 = lin(ks[4], ks[5], hidden_dim, output_dim)
    return (w1, b1, w2, b2, w3, b3)


if __name__ == "__main__":
    # Small shapes consistent with the module: output_dim must equal C*H*W so
    # the final .view back to NCHW is valid.
    B, C, H, W = 2, 4, 16, 16
    hidden_dim = 32
    output_dim = C * H * W
    chw = C * H * W

    key = jax.random.PRNGKey(0)
    k_img1, k_img2, k_par = jax.random.split(key, 3)

    img1 = jax.random.normal(k_img1, (B, C, H, W), jnp.float32)
    img2 = jax.random.normal(k_img2, (B, C, H, W), jnp.float32)
    params = init_params(k_par, C, H, W, hidden_dim, output_dim)
    prepared = prepare_params(params, chw)

    out = to_mlp_forward(img1, img2, prepared, C, H, W)
    out = jax.block_until_ready(out)
    assert out.shape == (B, C, H, W)

    # Reference 1: identical mixed-precision math in plain JAX using the same
    # prepared (padded, bf16) params — tight check of the kernel itself.
    w1a, w1b, b1p, w2p, b2p, w3p, b3p = prepared
    x1b = img1.reshape(B, -1).astype(jnp.bfloat16)
    x2b = img2.reshape(B, -1).astype(jnp.bfloat16)
    h1 = (jnp.dot(x1b, w1a, preferred_element_type=jnp.float32)
          + jnp.dot(x2b, w1b, preferred_element_type=jnp.float32))
    h1 = jnp.maximum(h1 + b1p, 0.0)
    h2 = jnp.maximum(jnp.dot(h1.astype(jnp.bfloat16), w2p,
                             preferred_element_type=jnp.float32) + b2p, 0.0)
    ref_mixed = (jnp.dot(h2.astype(jnp.bfloat16), w3p,
                         preferred_element_type=jnp.float32) + b3p)
    ref_mixed = ref_mixed.reshape(B, C, H, W)
    assert jnp.allclose(out, ref_mixed, atol=2e-3, rtol=2e-3)

    # Reference 2: full-f32 PyTorch-equivalent math (loose check; bf16 weights
    # shift results at the ~1e-2 relative level).
    wf1, bf1, wf2, bf2, wf3, bf3 = params
    x = jnp.concatenate([img1.reshape(B, -1), img2.reshape(B, -1)], axis=1)
    r = jnp.maximum(x @ wf1 + bf1, 0.0)
    r = jnp.maximum(r @ wf2 + bf2, 0.0)
    ref_f32 = (r @ wf3 + bf3).reshape(B, C, H, W)
    assert jnp.allclose(out, ref_f32, atol=1e-1, rtol=1e-1)

    print("KERNEL_OK")
</pallas_src>

<mosaic_0001>
module attributes {stable_mosaic.version = 11 : i64} {
  func.func @_mlp_kernel(%arg0: i32, %arg1: memref<2x1024xf32, #tpu.memory_space<vmem>>, %arg2: memref<2x1024xf32, #tpu.memory_space<vmem>>, %arg3: memref<1024x128xbf16, #tpu.memory_space<vmem>>, %arg4: memref<1024x128xbf16, #tpu.memory_space<vmem>>, %arg5: memref<1x128xf32, #tpu.memory_space<vmem>>, %arg6: memref<128x128xbf16, #tpu.memory_space<vmem>>, %arg7: memref<1x128xf32, #tpu.memory_space<vmem>>, %arg8: memref<128x1024xbf16, #tpu.memory_space<vmem>>, %arg9: memref<1x1024xf32, #tpu.memory_space<vmem>>, %arg10: memref<2x1024xf32, #tpu.memory_space<vmem>>) attributes {dimension_semantics = [#tpu.dimension_semantics<parallel>], iteration_bounds = array<i64: 1>, scalar_prefetch = 0 : i64, scratch_operands = 0 : i64, tpu.core_type = #tpu.core_type<tc>, window_params = [{transform_indices = @transform_0, window_bounds = array<i64: 2, 1024>}, {transform_indices = @transform_1, window_bounds = array<i64: 2, 1024>}, {pipeline_mode = #tpu.pipeline_mode<synchronous>, transform_indices = @transform_2, window_bounds = array<i64: 1024, 128>}, {pipeline_mode = #tpu.pipeline_mode<synchronous>, transform_indices = @transform_3, window_bounds = array<i64: 1024, 128>}, {pipeline_mode = #tpu.pipeline_mode<synchronous>, transform_indices = @transform_4, window_bounds = array<i64: 1, 128>}, {pipeline_mode = #tpu.pipeline_mode<synchronous>, transform_indices = @transform_5, window_bounds = array<i64: 128, 128>}, {pipeline_mode = #tpu.pipeline_mode<synchronous>, transform_indices = @transform_6, window_bounds = array<i64: 1, 128>}, {pipeline_mode = #tpu.pipeline_mode<synchronous>, transform_indices = @transform_7, window_bounds = array<i64: 128, 1024>}, {pipeline_mode = #tpu.pipeline_mode<synchronous>, transform_indices = @transform_8, window_bounds = array<i64: 1, 1024>}, {transform_indices = @transform_9, window_bounds = array<i64: 2, 1024>}]} {
    %c0 = arith.constant 0 : index
    %c0_0 = arith.constant 0 : index
    %0 = vector.load %arg1[%c0, %c0_0] : memref<2x1024xf32, #tpu.memory_space<vmem>>, vector<2x1024xf32>
    %1 = arith.truncf %0 : vector<2x1024xf32> to vector<2x1024xbf16>
    %c0_1 = arith.constant 0 : index
    %c0_2 = arith.constant 0 : index
    %2 = vector.load %arg2[%c0_1, %c0_2] : memref<2x1024xf32, #tpu.memory_space<vmem>>, vector<2x1024xf32>
    %3 = arith.truncf %2 : vector<2x1024xf32> to vector<2x1024xbf16>
    %c0_3 = arith.constant 0 : index
    %c0_4 = arith.constant 0 : index
    %4 = vector.load %arg3[%c0_3, %c0_4] : memref<1024x128xbf16, #tpu.memory_space<vmem>>, vector<1024x128xbf16>
    %cst = arith.constant dense<0.000000e+00> : vector<2x128xf32>
    %5 = tpu.matmul %1, %4, %cst {dimension_numbers = #tpu.dot_dimension_numbers<[1], [0], [0], [1], [0, 0, 1, 1], [], []>} : vector<2x1024xbf16>, vector<1024x128xbf16>, vector<2x128xf32> -> vector<2x128xf32>
    %c0_5 = arith.constant 0 : index
    %c0_6 = arith.constant 0 : index
    %6 = vector.load %arg4[%c0_5, %c0_6] : memref<1024x128xbf16, #tpu.memory_space<vmem>>, vector<1024x128xbf16>
    %cst_7 = arith.constant dense<0.000000e+00> : vector<2x128xf32>
    %7 = tpu.matmul %3, %6, %cst_7 {dimension_numbers = #tpu.dot_dimension_numbers<[1], [0], [0], [1], [0, 0, 1, 1], [], []>} : vector<2x1024xbf16>, vector<1024x128xbf16>, vector<2x128xf32> -> vector<2x128xf32>
    %8 = arith.addf %5, %7 : vector<2x128xf32>
    %c0_8 = arith.constant 0 : index
    %c0_9 = arith.constant 0 : index
    %9 = vector.load %arg5[%c0_8, %c0_9] : memref<1x128xf32, #tpu.memory_space<vmem>>, vector<1x128xf32>
    %10 = vector.broadcast %9 : vector<1x128xf32> to vector<2x128xf32>
    %11 = arith.addf %8, %10 : vector<2x128xf32>
    %cst_10 = arith.constant 0.000000e+00 : f32
    %12 = vector.broadcast %cst_10 : f32 to vector<2x128xf32>
    %13 = arith.maximumf %11, %12 : vector<2x128xf32>
    %14 = arith.truncf %13 : vector<2x128xf32> to vector<2x128xbf16>
    %c0_11 = arith.constant 0 : index
    %c0_12 = arith.constant 0 : index
    %15 = vector.load %arg6[%c0_11, %c0_12] : memref<128x128xbf16, #tpu.memory_space<vmem>>, vector<128x128xbf16>
    %cst_13 = arith.constant dense<0.000000e+00> : vector<2x128xf32>
    %16 = tpu.matmul %14, %15, %cst_13 {dimension_numbers = #tpu.dot_dimension_numbers<[1], [0], [0], [1], [0, 0, 1, 1], [], []>} : vector<2x128xbf16>, vector<128x128xbf16>, vector<2x128xf32> -> vector<2x128xf32>
    %c0_14 = arith.constant 0 : index
    %c0_15 = arith.constant 0 : index
    %17 = vector.load %arg7[%c0_14, %c0_15] : memref<1x128xf32, #tpu.memory_space<vmem>>, vector<1x128xf32>
    %18 = vector.broadcast %17 : vector<1x128xf32> to vector<2x128xf32>
    %19 = arith.addf %16, %18 : vector<2x128xf32>
    %cst_16 = arith.constant 0.000000e+00 : f32
    %20 = vector.broadcast %cst_16 : f32 to vector<2x128xf32>
    %21 = arith.maximumf %19, %20 : vector<2x128xf32>
    %22 = arith.truncf %21 : vector<2x128xf32> to vector<2x128xbf16>
    %c0_17 = arith.constant 0 : index
    %c0_18 = arith.constant 0 : index
    %23 = vector.load %arg8[%c0_17, %c0_18] : memref<128x1024xbf16, #tpu.memory_space<vmem>>, vector<128x1024xbf16>
    %cst_19 = arith.constant dense<0.000000e+00> : vector<2x1024xf32>
    %24 = tpu.matmul %22, %23, %cst_19 {dimension_numbers = #tpu.dot_dimension_numbers<[1], [0], [0], [1], [0, 0, 1, 1], [], []>} : vector<2x128xbf16>, vector<128x1024xbf16>, vector<2x1024xf32> -> vector<2x1024xf32>
    %c0_20 = arith.constant 0 : index
    %c0_21 = arith.constant 0 : index
    %25 = vector.load %arg9[%c0_20, %c0_21] : memref<1x1024xf32, #tpu.memory_space<vmem>>, vector<1x1024xf32>
    %26 = vector.broadcast %25 : vector<1x1024xf32> to vector<2x1024xf32>
    %27 = arith.addf %24, %26 : vector<2x1024xf32>
    %c0_22 = arith.constant 0 : index
    %c0_23 = arith.constant 0 : index
    %28 = vector.load %arg10[%c0_22, %c0_23] : memref<2x1024xf32, #tpu.memory_space<vmem>>, vector<2x1024xf32>
    tpu.vector_store %arg10[%c0_22, %c0_23], %27 {strides = array<i32>} : memref<2x1024xf32, #tpu.memory_space<vmem>>, vector<2x1024xf32>,
    return
  }
  func.func @transform_0(%arg0: i32) -> (i32, i32) {
    %c0_i32 = arith.constant 0 : i32
    %c0_i32_0 = arith.constant 0 : i32
    return %arg0, %c0_i32 : i32, i32
  }
  func.func @transform_1(%arg0: i32) -> (i32, i32) {
    %c0_i32 = arith.constant 0 : i32
    %c0_i32_0 = arith.constant 0 : i32
    return %arg0, %c0_i32 : i32, i32
  }
  func.func @transform_2(%arg0: i32) -> (i32, i32) {
    %c0_i32 = arith.constant 0 : i32
    %c0_i32_0 = arith.constant 0 : i32
    %c0_i32_1 = arith.constant 0 : i32
    return %c0_i32, %c0_i32_0 : i32, i32
  }
  func.func @transform_3(%arg0: i32) -> (i32, i32) {
    %c0_i32 = arith.constant 0 : i32
    %c0_i32_0 = arith.constant 0 : i32
    %c0_i32_1 = arith.constant 0 : i32
    return %c0_i32, %c0_i32_0 : i32, i32
  }
  func.func @transform_4(%arg0: i32) -> (i32, i32) {
    %c0_i32 = arith.constant 0 : i32
    %c0_i32_0 = arith.constant 0 : i32
    %c0_i32_1 = arith.constant 0 : i32
    return %c0_i32, %c0_i32_0 : i32, i32
  }
  func.func @transform_5(%arg0: i32) -> (i32, i32) {
    %c0_i32 = arith.constant 0 : i32
    %c0_i32_0 = arith.constant 0 : i32
    %c0_i32_1 = arith.constant 0 : i32
    return %c0_i32, %c0_i32_0 : i32, i32
  }
  func.func @transform_6(%arg0: i32) -> (i32, i32) {
    %c0_i32 = arith.constant 0 : i32
    %c0_i32_0 = arith.constant 0 : i32
    %c0_i32_1 = arith.constant 0 : i32
    return %c0_i32, %c0_i32_0 : i32, i32
  }
  func.func @transform_7(%arg0: i32) -> (i32, i32) {
    %c0_i32 = arith.constant 0 : i32
    %c0_i32_0 = arith.constant 0 : i32
    %c0_i32_1 = arith.constant 0 : i32
    return %c0_i32, %c0_i32_0 : i32, i32
  }
  func.func @transform_8(%arg0: i32) -> (i32, i32) {
    %c0_i32 = arith.constant 0 : i32
    %c0_i32_0 = arith.constant 0 : i32
    %c0_i32_1 = arith.constant 0 : i32
    return %c0_i32, %c0_i32_0 : i32, i32
  }
  func.func @transform_9(%arg0: i32) -> (i32, i32) {
    %c0_i32 = arith.constant 0 : i32
    %c0_i32_0 = arith.constant 0 : i32
    return %arg0, %c0_i32 : i32, i32
  }
}

</mosaic_0001>

<llo_original>
// kernel: tpu_custom_call.1
$region0: #{tpu_custom_call.1}
  #allocation0 [shape = 'u32[]', space=smem, size = 0x4, offset = 0x4, fixed_abs, tag = 'smem constant byte address 0x4 - core index']
  #allocation1 [shape = 'u32[72,128]{1,0:T(1,128)}', space=vmem, size = 0x9000, scoped, tag = 'internal scratch']
  %s0 = inlined_call_operand.hbm [shape: f32[2,1024], index: 0, kind: input, shape index: {}]
  %s1 = inlined_call_operand.hbm [shape: f32[2,1024], index: 1, kind: input, shape index: {}]
  %s2 = inlined_call_operand.hbm [shape: bf16[1024,128], index: 2, kind: input, shape index: {}]
  %s3 = inlined_call_operand.hbm [shape: bf16[1024,128], index: 3, kind: input, shape index: {}]
  %s4 = inlined_call_operand.vmem [shape: f32[1,128], index: 4, kind: input, shape index: {}]
  %s5 = inlined_call_operand.hbm [shape: bf16[128,128], index: 5, kind: input, shape index: {}]
  %s6 = inlined_call_operand.vmem [shape: f32[1,128], index: 6, kind: input, shape index: {}]
  %s7 = inlined_call_operand.hbm [shape: bf16[128,1024], index: 7, kind: input, shape index: {}]
  %s8 = inlined_call_operand.hbm [shape: f32[1,1024], index: 8, kind: input, shape index: {}]
  %s9 = inlined_call_operand.hbm [shape: f32[2,1024], index: 9, kind: output, shape index: {}]
  %s10 = sld [smem:[#allocation0]]
  $region74: #{tpu_custom_call.1} parent=0
    _
  %s12 = ssub.s32 1, %s10
  %s13 = scalar_select 0, %s12, %s10
  $region1: #{tpu_custom_call.1} parent=0
    #allocation2 [shape = 'u8[8192]{0}', space=vmem, size = 0x2000, scoped, tag = 'input window, operand 0, single buffered']
    #allocation3 [shape = 's32[1]{0}', space=sflag, size = 0x4, scoped, tag = 'scoped memory for tpu_custom_call.1']
    #allocation4 [shape = 's32[1]{0}', space=sflag, size = 0x4, scoped, tag = 'scoped memory for tpu_custom_call.1']
    #allocation5 [shape = 'u8[8192]{0}', space=vmem, size = 0x2000, scoped, tag = 'input window, operand 1, single buffered']
    #allocation6 [shape = 's32[1]{0}', space=sflag, size = 0x4, scoped, tag = 'scoped memory for tpu_custom_call.1']
    #allocation7 [shape = 'u8[262144]{0}', space=vmem, size = 0x40000, scoped, tag = 'input window, operand 2, single buffered']
    #allocation8 [shape = 'u8[262144]{0}', space=vmem, size = 0x40000, scoped, tag = 'input window, operand 3, single buffered']
    #allocation9 [shape = 's32[1]{0}', space=sflag, size = 0x4, scoped, tag = 'scoped memory for tpu_custom_call.1']
    #allocation10 [shape = 'u8[32768]{0}', space=vmem, size = 0x8000, scoped, tag = 'input window, operand 5, single buffered']
    #allocation11 [shape = 'u8[262144]{0}', space=vmem, size = 0x40000, scoped, tag = 'input window, operand 7, single buffered']
    #allocation12 [shape = 's32[1]{0}', space=sflag, size = 0x4, scoped, tag = 'scoped memory for tpu_custom_call.1']
    #allocation13 [shape = 'u8[4096]{0}', space=vmem, size = 0x1000, scoped, tag = 'input window, operand 8, single buffered']
    #allocation14 [shape = 'u8[8192]{0}', space=vmem, size = 0x2000, scoped, tag = 'output window, operand 0, single buffered']
    %14 = vsyncpa [#allocation3], 0
    %15 = vsyncpa [#allocation6], 0
    %16 = vsyncpa [#allocation9], 0
    %17 = vsyncpa [#allocation12], 0
    %18 = vsyncpa [#allocation4], 0
    // Predicated region
    $region2: #{tpu_custom_call.1} parent=1 // pred_check
      _
    $region3: #{tpu_custom_call.1} parent=1 // pred_check_branch
      %20 = sbr.rel (0) target = $region5
    $region4: #{tpu_custom_call.1} parent=1 // pred_region
      %22 = vsyncadd [#allocation3], 0
      %s24 = sshll.u32 %s0, 4
      %s25 = int_to_ptr.hbm [resolvable:$true] %s24
      %s26 = sshll.u32 [#allocation2], 4
      %s27 = int_to_ptr.vmem [resolvable:$true] %s26
      %29 = dma.hbm_to_vmem [thread:$0]  %s25, 256, %s27, [#allocation3]
    $region5: #{tpu_custom_call.1} parent=1 // pred_fallthru
      _
    // Predicated region
    $region6: #{tpu_custom_call.1} parent=1 // pred_check
      _
    $region7: #{tpu_custom_call.1} parent=1 // pred_check_branch
      %31 = sbr.rel (0) target = $region9
    $region8: #{tpu_custom_call.1} parent=1 // pred_region
      %33 = vsyncadd [#allocation6], 0
      %s35 = sshll.u32 %s1, 4
      %s36 = int_to_ptr.hbm [resolvable:$true] %s35
      %s37 = sshll.u32 [#allocation5], 4
      %s38 = int_to_ptr.vmem [resolvable:$true] %s37
      %40 = dma.hbm_to_vmem [thread:$0]  %s36, 256, %s38, [#allocation6]
    $region9: #{tpu_custom_call.1} parent=1 // pred_fallthru
      _
    // Predicated region
    $region10: #{tpu_custom_call.1} parent=1 // pred_check
      _
    $region11: #{tpu_custom_call.1} parent=1 // pred_check_branch
      %42 = sbr.rel (0) target = $region13
    $region12: #{tpu_custom_call.1} parent=1 // pred_region
      %44 = vsyncadd [#allocation6], 0
      %s45 = sshll.u32 %s2, 4
      %s46 = int_to_ptr.hbm [resolvable:$true] %s45
      %s47 = sshll.u32 [#allocation7], 4
      %s48 = int_to_ptr.vmem [resolvable:$true] %s47
      %53 = dma.hbm_to_vmem [thread:$0]  %s46, 8192, %s48, [#allocation6], 64, 64, 4
    $region13: #{tpu_custom_call.1} parent=1 // pred_fallthru
      _
    // Predicated region
    $region14: #{tpu_custom_call.1} parent=1 // pred_check
      _
    $region15: #{tpu_custom_call.1} parent=1 // pred_check_branch
      %55 = sbr.rel (0) target = $region17
    $region16: #{tpu_custom_call.1} parent=1 // pred_region
      %57 = vsyncadd [#allocation9], 0
      %s58 = sshll.u32 %s3, 4
      %s59 = int_to_ptr.hbm [resolvable:$true] %s58
      %s60 = sshll.u32 [#allocation8], 4
      %s61 = int_to_ptr.vmem [resolvable:$true] %s60
      %66 = dma.hbm_to_vmem [thread:$0]  %s59, 8192, %s61, [#allocation9], 64, 64, 4
    $region17: #{tpu_custom_call.1} parent=1 // pred_fallthru
      _
    // Predicated region
    $region18: #{tpu_custom_call.1} parent=1 // pred_check
      _
    $region19: #{tpu_custom_call.1} parent=1 // pred_check_branch
      %68 = sbr.rel (0) target = $region21
    $region20: #{tpu_custom_call.1} parent=1 // pred_region
      _
    $region21: #{tpu_custom_call.1} parent=1 // pred_fallthru
      _
    // Predicated region
    $region22: #{tpu_custom_call.1} parent=1 // pred_check
      _
    $region23: #{tpu_custom_call.1} parent=1 // pred_check_branch
      %70 = sbr.rel (0) target = $region25
    $region24: #{tpu_custom_call.1} parent=1 // pred_region
      %72 = vsyncadd [#allocation9], 0
      %s73 = sshll.u32 %s5, 4
      %s74 = int_to_ptr.hbm [resolvable:$true] %s73
      %s75 = sshll.u32 [#allocation10], 4
      %s76 = int_to_ptr.vmem [resolvable:$true] %s75
      %81 = dma.hbm_to_vmem [thread:$0]  %s74, 1024, %s76, [#allocation9], 64, 64, 4
    $region25: #{tpu_custom_call.1} parent=1 // pred_fallthru
      _
    // Predicated region
    $region26: #{tpu_custom_call.1} parent=1 // pred_check
      _
    $region27: #{tpu_custom_call.1} parent=1 // pred_check_branch
      %83 = sbr.rel (0) target = $region29
    $region28: #{tpu_custom_call.1} parent=1 // pred_region
      _
    $region29: #{tpu_custom_call.1} parent=1 // pred_fallthru
      _
    // Predicated region
    $region30: #{tpu_custom_call.1} parent=1 // pred_check
      _
    $region31: #{tpu_custom_call.1} parent=1 // pred_check_branch
      %85 = sbr.rel (0) target = $region33
    $region32: #{tpu_custom_call.1} parent=1 // pred_region
      %87 = vsyncadd [#allocation12], 0
      %s88 = sshll.u32 %s7, 4
      %s89 = int_to_ptr.hbm [resolvable:$true] %s88
      %s90 = sshll.u32 [#allocation11], 4
      %s91 = int_to_ptr.vmem [resolvable:$true] %s90
      %96 = dma.hbm_to_vmem [thread:$0]  %s89, 8192, %s91, [#allocation12], 512, 512, 32
    $region33: #{tpu_custom_call.1} parent=1 // pred_fallthru
      _
    // Predicated region
    $region34: #{tpu_custom_call.1} parent=1 // pred_check
      _
    $region35: #{tpu_custom_call.1} parent=1 // pred_check_branch
      %98 = sbr.rel (0) target = $region37
    $region36: #{tpu_custom_call.1} parent=1 // pred_region
      %100 = vsyncadd [#allocation12], 0
      %s102 = sshll.u32 %s8, 4
      %s103 = int_to_ptr.hbm [resolvable:$true] %s102
      %s104 = sshll.u32 [#allocation13], 4
      %s105 = int_to_ptr.vmem [resolvable:$true] %s104
      %107 = dma.hbm_to_vmem [thread:$0]  %s103, 128, %s105, [#allocation12]
    $region37: #{tpu_custom_call.1} parent=1 // pred_fallthru
      _
    // Predicated region
    $region38: #{tpu_custom_call.1} parent=1 // pred_check
      _
    $region39: #{tpu_custom_call.1} parent=1 // pred_check_branch
      %109 = sbr.rel (0) target = $region41
    $region40: #{tpu_custom_call.1} parent=1 // pred_region
      %111 = dma.done [#allocation3], 256
    $region41: #{tpu_custom_call.1} parent=1 // pred_fallthru
      _
    // Predicated region
    $region42: #{tpu_custom_call.1} parent=1 // pred_check
      _
    $region43: #{tpu_custom_call.1} parent=1 // pred_check_branch
      %113 = sbr.rel (0) target = $region45
    $region44: #{tpu_custom_call.1} parent=1 // pred_region
      %115 = dma.done [#allocation6], 256
    $region45: #{tpu_custom_call.1} parent=1 // pred_fallthru
      _
    // Predicated region
    $region46: #{tpu_custom_call.1} parent=1 // pred_check
      _
    $region47: #{tpu_custom_call.1} parent=1 // pred_check_branch
      %117 = sbr.rel (0) target = $region49
    $region48: #{tpu_custom_call.1} parent=1 // pred_region
      %119 = dma.done [#allocation6], 8192
    $region49: #{tpu_custom_call.1} parent=1 // pred_fallthru
      _
    // Predicated region
    $region50: #{tpu_custom_call.1} parent=1 // pred_check
      _
    $region51: #{tpu_custom_call.1} parent=1 // pred_check_branch
      %121 = sbr.rel (0) target = $region53
    $region52: #{tpu_custom_call.1} parent=1 // pred_region
      %123 = dma.done [#allocation9], 8192
    $region53: #{tpu_custom_call.1} parent=1 // pred_fallthru
      _
    // Predicated region
    $region54: #{tpu_custom_call.1} parent=1 // pred_check
      _
    $region55: #{tpu_custom_call.1} parent=1 // pred_check_branch
      %125 = sbr.rel (0) target = $region57
    $region56: #{tpu_custom_call.1} parent=1 // pred_region
      %127 = dma.done [#allocation9], 1024
    $region57: #{tpu_custom_call.1} parent=1 // pred_fallthru
      _
    // Predicated region
    $region58: #{tpu_custom_call.1} parent=1 // pred_check
      _
    $region59: #{tpu_custom_call.1} parent=1 // pred_check_branch
      %129 = sbr.rel (0) target = $region61
    $region60: #{tpu_custom_call.1} parent=1 // pred_region
      %131 = dma.done [#allocation12], 8192
    $region61: #{tpu_custom_call.1} parent=1 // pred_fallthru
      _
    // Predicated region
    $region62: #{tpu_custom_call.1} parent=1 // pred_check
      _
    $region63: #{tpu_custom_call.1} parent=1 // pred_check_branch
      %133 = sbr.rel (0) target = $region65
    $region64: #{tpu_custom_call.1} parent=1 // pred_region
      %135 = dma.done [#allocation12], 128
    $region65: #{tpu_custom_call.1} parent=1 // pred_fallthru
      _
    %v136 = vld [vmem:[#allocation2] sm:$0xff]
    %v137 = vld [vmem:[#allocation2 + $0x8] sm:$0xff]
    %140 = vst [vmem:[#allocation1] ss:$4 sm:$0xff] %v136
    %s141 = scalar_lea.vmem [#allocation1], 32
    %142 = vst [vmem:[%s141] ss:$4 sm:$0xff] %v137
    %v143 = vld.sshfl [vmem:[#allocation1] sm:$0xff pattern:$0x73625140]
    %v144 = vld.sshfl [vmem:[#allocation1 + $0x8] sm:$0xff pattern:$0x73625140]
    %v145 = vld.sshfl [vmem:[#allocation1 + $0x10] sm:$0xff pattern:$0x73625140]
    %v146 = vld.sshfl [vmem:[#allocation1 + $0x18] sm:$0xff pattern:$0x73625140]
    %v147 = vld.sshfl [vmem:[#allocation1 + $0x20] sm:$0xff pattern:$0x73625140]
    %v148 = vld.sshfl [vmem:[#allocation1 + $0x28] sm:$0xff pattern:$0x73625140]
    %v149 = vld.sshfl [vmem:[#allocation1 + $0x30] sm:$0xff pattern:$0x73625140]
    %v150 = vld.sshfl [vmem:[#allocation1 + $0x38] sm:$0xff pattern:$0x73625140]
    %v159 = vpack.c.bf16 %v143, %v143
    %v160 = vpack.c.bf16 %v144, %v144
    %v161 = vpack.c.bf16 %v145, %v145
    %v162 = vpack.c.bf16 %v146, %v146
    %v163 = vpack.c.bf16 %v147, %v147
    %v164 = vpack.c.bf16 %v148, %v148
    %v165 = vpack.c.bf16 %v149, %v149
    %v166 = vpack.c.bf16 %v150, %v150
    %v167 = vld [vmem:[#allocation5] sm:$0xff]
    %v168 = vld [vmem:[#allocation5 + $0x8] sm:$0xff]
    %171 = vst [vmem:[#allocation1] ss:$4 sm:$0xff] %v167
    %s172 = scalar_lea.vmem [#allocation1], 32
    %173 = vst [vmem:[%s172] ss:$4 sm:$0xff] %v168
    %v174 = vld.sshfl [vmem:[#allocation1] sm:$0xff pattern:$0x73625140]
    %v175 = vld.sshfl [vmem:[#allocation1 + $0x8] sm:$0xff pattern:$0x73625140]
    %v176 = vld.sshfl [vmem:[#allocation1 + $0x10] sm:$0xff pattern:$0x73625140]
    %v177 = vld.sshfl [vmem:[#allocation1 + $0x18] sm:$0xff pattern:$0x73625140]
    %v178 = vld.sshfl [vmem:[#allocation1 + $0x20] sm:$0xff pattern:$0x73625140]
    %v179 = vld.sshfl [vmem:[#allocation1 + $0x28] sm:$0xff pattern:$0x73625140]
    %v180 = vld.sshfl [vmem:[#allocation1 + $0x30] sm:$0xff pattern:$0x73625140]
    %v181 = vld.sshfl [vmem:[#allocation1 + $0x38] sm:$0xff pattern:$0x73625140]
    %v190 = vpack.c.bf16 %v174, %v174
    %v191 = vpack.c.bf16 %v175, %v175
    %v192 = vpack.c.bf16 %v176, %v176
    %v193 = vpack.c.bf16 %v177, %v177
    %v194 = vpack.c.bf16 %v178, %v178
    %v195 = vpack.c.bf16 %v179, %v179
    %v196 = vpack.c.bf16 %v180, %v180
    %v197 = vpack.c.bf16 %v181, %v181
    %v198 = vld [vmem:[#allocation7] sm:$0xf]
    %v199 = vld [vmem:[#allocation7 + $0x4] sm:$0xf]
    %v200 = vld [vmem:[#allocation7 + $0x8] sm:$0xf]
    %v201 = vld [vmem:[#allocation7 + $0xc] sm:$0xf]
    %v202 = vld [vmem:[#allocation7 + $0x10] sm:$0xf]
    %v203 = vld [vmem:[#allocation7 + $0x14] sm:$0xf]
    %v204 = vld [vmem:[#allocation7 + $0x18] sm:$0xf]
    %v205 = vld [vmem:[#allocation7 + $0x1c] sm:$0xf]
    %v206 = vld [vmem:[#allocation7 + $0x20] sm:$0xf]
    %v207 = vld [vmem:[#allocation7 + $0x24] sm:$0xf]
    %v208 = vld [vmem:[#allocation7 + $0x28] sm:$0xf]
    %v209 = vld [vmem:[#allocation7 + $0x2c] sm:$0xf]
    %v210 = vld [vmem:[#allocation7 + $0x30] sm:$0xf]
    %v211 = vld [vmem:[#allocation7 + $0x34] sm:$0xf]
    %v212 = vld [vmem:[#allocation7 + $0x38] sm:$0xf]
    %v213 = vld [vmem:[#allocation7 + $0x3c] sm:$0xf]
    %v214 = vld [vmem:[#allocation7 + $0x40] sm:$0xf]
    %v215 = vld [vmem:[#allocation7 + $0x44] sm:$0xf]
    %v216 = vld [vmem:[#allocation7 + $0x48] sm:$0xf]
    %v217 = vld [vmem:[#allocation7 + $0x4c] sm:$0xf]
    %v218 = vld [vmem:[#allocation7 + $0x50] sm:$0xf]
    %v219 = vld [vmem:[#allocation7 + $0x54] sm:$0xf]
    %v220 = vld [vmem:[#allocation7 + $0x58] sm:$0xf]
    %v221 = vld [vmem:[#allocation7 + $0x5c] sm:$0xf]
    %v222 = vld [vmem:[#allocation7 + $0x60] sm:$0xf]
    %v223 = vld [vmem:[#allocation7 + $0x64] sm:$0xf]
    %v224 = vld [vmem:[#allocation7 + $0x68] sm:$0xf]
    %v225 = vld [vmem:[#allocation7 + $0x6c] sm:$0xf]
    %v226 = vld [vmem:[#allocation7 + $0x70] sm:$0xf]
    %v227 = vld [vmem:[#allocation7 + $0x74] sm:$0xf]
    %v228 = vld [vmem:[#allocation7 + $0x78] sm:$0xf]
    %v229 = vld [vmem:[#allocation7 + $0x7c] sm:$0xf]
    %v230 = vld [vmem:[#allocation7 + $0x80] sm:$0xf]
    %v231 = vld [vmem:[#allocation7 + $0x84] sm:$0xf]
    %v232 = vld [vmem:[#allocation7 + $0x88] sm:$0xf]
    %v233 = vld [vmem:[#allocation7 + $0x8c] sm:$0xf]
    %v234 = vld [vmem:[#allocation7 + $0x90] sm:$0xf]
    %v235 = vld [vmem:[#allocation7 + $0x94] sm:$0xf]
    %v236 = vld [vmem:[#allocation7 + $0x98] sm:$0xf]
    %v237 = vld [vmem:[#allocation7 + $0x9c] sm:$0xf]
    %v238 = vld [vmem:[#allocation7 + $0xa0] sm:$0xf]
    %v239 = vld [vmem:[#allocation7 + $0xa4] sm:$0xf]
    %v240 = vld [vmem:[#allocation7 + $0xa8] sm:$0xf]
    %v241 = vld [vmem:[#allocation7 + $0xac] sm:$0xf]
    %v242 = vld [vmem:[#allocation7 + $0xb0] sm:$0xf]
    %v243 = vld [vmem:[#allocation7 + $0xb4] sm:$0xf]
    %v244 = vld [vmem:[#allocation7 + $0xb8] sm:$0xf]
    %v245 = vld [vmem:[#allocation7 + $0xbc] sm:$0xf]
    %v246 = vld [vmem:[#allocation7 + $0xc0] sm:$0xf]
    %v247 = vld [vmem:[#allocation7 + $0xc4] sm:$0xf]
    %v248 = vld [vmem:[#allocation7 + $0xc8] sm:$0xf]
    %v249 = vld [vmem:[#allocation7 + $0xcc] sm:$0xf]
    %v250 = vld [vmem:[#allocation7 + $0xd0] sm:$0xf]
    %v251 = vld [vmem:[#allocation7 + $0xd4] sm:$0xf]
    %v252 = vld [vmem:[#allocation7 + $0xd8] sm:$0xf]
    %v253 = vld [vmem:[#allocation7 + $0xdc] sm:$0xf]
    %v254 = vld [vmem:[#allocation7 + $0xe0] sm:$0xf]
    %v255 = vld [vmem:[#allocation7 + $0xe4] sm:$0xf]
    %v256 = vld [vmem:[#allocation7 + $0xe8] sm:$0xf]
    %v257 = vld [vmem:[#allocation7 + $0xec] sm:$0xf]
    %v258 = vld [vmem:[#allocation7 + $0xf0] sm:$0xf]
    %v259 = vld [vmem:[#allocation7 + $0xf4] sm:$0xf]
    %v260 = vld [vmem:[#allocation7 + $0xf8] sm:$0xf]
    %v261 = vld [vmem:[#allocation7 + $0xfc] sm:$0xf]
    %v262 = vld [vmem:[#allocation7 + $0x100] sm:$0xf]
    %v263 = vld [vmem:[#allocation7 + $0x104] sm:$0xf]
    %v264 = vld [vmem:[#allocation7 + $0x108] sm:$0xf]
    %v265 = vld [vmem:[#allocation7 + $0x10c] sm:$0xf]
    %v266 = vld [vmem:[#allocation7 + $0x110] sm:$0xf]
    %v267 = vld [vmem:[#allocation7 + $0x114] sm:$0xf]
    %v268 = vld [vmem:[#allocation7 + $0x118] sm:$0xf]
    %v269 = vld [vmem:[#allocation7 + $0x11c] sm:$0xf]
    %v270 = vld [vmem:[#allocation7 + $0x120] sm:$0xf]
    %v271 = vld [vmem:[#allocation7 + $0x124] sm:$0xf]
    %v272 = vld [vmem:[#allocation7 + $0x128] sm:$0xf]
    %v273 = vld [vmem:[#allocation7 + $0x12c] sm:$0xf]
    %v274 = vld [vmem:[#allocation7 + $0x130] sm:$0xf]
    %v275 = vld [vmem:[#allocation7 + $0x134] sm:$0xf]
    %v276 = vld [vmem:[#allocation7 + $0x138] sm:$0xf]
    %v277 = vld [vmem:[#allocation7 + $0x13c] sm:$0xf]
    %v278 = vld [vmem:[#allocation7 + $0x140] sm:$0xf]
    %v279 = vld [vmem:[#allocation7 + $0x144] sm:$0xf]
    %v280 = vld [vmem:[#allocation7 + $0x148] sm:$0xf]
    %v281 = vld [vmem:[#allocation7 + $0x14c] sm:$0xf]
    %v282 = vld [vmem:[#allocation7 + $0x150] sm:$0xf]
    %v283 = vld [vmem:[#allocation7 + $0x154] sm:$0xf]
    %v284 = vld [vmem:[#allocation7 + $0x158] sm:$0xf]
    %v285 = vld [vmem:[#allocation7 + $0x15c] sm:$0xf]
    %v286 = vld [vmem:[#allocation7 + $0x160] sm:$0xf]
    %v287 = vld [vmem:[#allocation7 + $0x164] sm:$0xf]
    %v288 = vld [vmem:[#allocation7 + $0x168] sm:$0xf]
    %v289 = vld [vmem:[#allocation7 + $0x16c] sm:$0xf]
    %v290 = vld [vmem:[#allocation7 + $0x170] sm:$0xf]
    %v291 = vld [vmem:[#allocation7 + $0x174] sm:$0xf]
    %v292 = vld [vmem:[#allocation7 + $0x178] sm:$0xf]
    %v293 = vld [vmem:[#allocation7 + $0x17c] sm:$0xf]
    %v294 = vld [vmem:[#allocation7 + $0x180] sm:$0xf]
    %v295 = vld [vmem:[#allocation7 + $0x184] sm:$0xf]
    %v296 = vld [vmem:[#allocation7 + $0x188] sm:$0xf]
    %v297 = vld [vmem:[#allocation7 + $0x18c] sm:$0xf]
    %v298 = vld [vmem:[#allocation7 + $0x190] sm:$0xf]
    %v299 = vld [vmem:[#allocation7 + $0x194] sm:$0xf]
    %v300 = vld [vmem:[#allocation7 + $0x198] sm:$0xf]
    %v301 = vld [vmem:[#allocation7 + $0x19c] sm:$0xf]
    %v302 = vld [vmem:[#allocation7 + $0x1a0] sm:$0xf]
    %v303 = vld [vmem:[#allocation7 + $0x1a4] sm:$0xf]
    %v304 = vld [vmem:[#allocation7 + $0x1a8] sm:$0xf]
    %v305 = vld [vmem:[#allocation7 + $0x1ac] sm:$0xf]
    %v306 = vld [vmem:[#allocation7 + $0x1b0] sm:$0xf]
    %v307 = vld [vmem:[#allocation7 + $0x1b4] sm:$0xf]
    %v308 = vld [vmem:[#allocation7 + $0x1b8] sm:$0xf]
    %v309 = vld [vmem:[#allocation7 + $0x1bc] sm:$0xf]
    %v310 = vld [vmem:[#allocation7 + $0x1c0] sm:$0xf]
    %v311 = vld [vmem:[#allocation7 + $0x1c4] sm:$0xf]
    %v312 = vld [vmem:[#allocation7 + $0x1c8] sm:$0xf]
    %v313 = vld [vmem:[#allocation7 + $0x1cc] sm:$0xf]
    %v314 = vld [vmem:[#allocation7 + $0x1d0] sm:$0xf]
    %v315 = vld [vmem:[#allocation7 + $0x1d4] sm:$0xf]
    %v316 = vld [vmem:[#allocation7 + $0x1d8] sm:$0xf]
    %v317 = vld [vmem:[#allocation7 + $0x1dc] sm:$0xf]
    %v318 = vld [vmem:[#allocation7 + $0x1e0] sm:$0xf]
    %v319 = vld [vmem:[#allocation7 + $0x1e4] sm:$0xf]
    %v320 = vld [vmem:[#allocation7 + $0x1e8] sm:$0xf]
    %v321 = vld [vmem:[#allocation7 + $0x1ec] sm:$0xf]
    %v322 = vld [vmem:[#allocation7 + $0x1f0] sm:$0xf]
    %v323 = vld [vmem:[#allocation7 + $0x1f4] sm:$0xf]
    %v324 = vld [vmem:[#allocation7 + $0x1f8] sm:$0xf]
    %v325 = vld [vmem:[#allocation7 + $0x1fc] sm:$0xf]
    %v326 = vld [vmem:[#allocation8] sm:$0xf]
    %v327 = vld [vmem:[#allocation8 + $0x4] sm:$0xf]
    %v328 = vld [vmem:[#allocation8 + $0x8] sm:$0xf]
    %v329 = vld [vmem:[#allocation8 + $0xc] sm:$0xf]
    %v330 = vld [vmem:[#allocation8 + $0x10] sm:$0xf]
    %v331 = vld [vmem:[#allocation8 + $0x14] sm:$0xf]
    %v332 = vld [vmem:[#allocation8 + $0x18] sm:$0xf]
    %v333 = vld [vmem:[#allocation8 + $0x1c] sm:$0xf]
    %v334 = vld [vmem:[#allocation8 + $0x20] sm:$0xf]
    %v335 = vld [vmem:[#allocation8 + $0x24] sm:$0xf]
    %v336 = vld [vmem:[#allocation8 + $0x28] sm:$0xf]
    %v337 = vld [vmem:[#allocation8 + $0x2c] sm:$0xf]
    %v338 = vld [vmem:[#allocation8 + $0x30] sm:$0xf]
    %v339 = vld [vmem:[#allocation8 + $0x34] sm:$0xf]
    %v340 = vld [vmem:[#allocation8 + $0x38] sm:$0xf]
    %v341 = vld [vmem:[#allocation8 + $0x3c] sm:$0xf]
    %v342 = vld [vmem:[#allocation8 + $0x40] sm:$0xf]
    %v343 = vld [vmem:[#allocation8 + $0x44] sm:$0xf]
    %v344 = vld [vmem:[#allocation8 + $0x48] sm:$0xf]
    %v345 = vld [vmem:[#allocation8 + $0x4c] sm:$0xf]
    %v346 = vld [vmem:[#allocation8 + $0x50] sm:$0xf]
    %v347 = vld [vmem:[#allocation8 + $0x54] sm:$0xf]
    %v348 = vld [vmem:[#allocation8 + $0x58] sm:$0xf]
    %v349 = vld [vmem:[#allocation8 + $0x5c] sm:$0xf]
    %v350 = vld [vmem:[#allocation8 + $0x60] sm:$0xf]
    %v351 = vld [vmem:[#allocation8 + $0x64] sm:$0xf]
    %v352 = vld [vmem:[#allocation8 + $0x68] sm:$0xf]
    %v353 = vld [vmem:[#allocation8 + $0x6c] sm:$0xf]
    %v354 = vld [vmem:[#allocation8 + $0x70] sm:$0xf]
    %v355 = vld [vmem:[#allocation8 + $0x74] sm:$0xf]
    %v356 = vld [vmem:[#allocation8 + $0x78] sm:$0xf]
    %v357 = vld [vmem:[#allocation8 + $0x7c] sm:$0xf]
    %v358 = vld [vmem:[#allocation8 + $0x80] sm:$0xf]
    %v359 = vld [vmem:[#allocation8 + $0x84] sm:$0xf]
    %v360 = vld [vmem:[#allocation8 + $0x88] sm:$0xf]
    %v361 = vld [vmem:[#allocation8 + $0x8c] sm:$0xf]
    %v362 = vld [vmem:[#allocation8 + $0x90] sm:$0xf]
    %v363 = vld [vmem:[#allocation8 + $0x94] sm:$0xf]
    %v364 = vld [vmem:[#allocation8 + $0x98] sm:$0xf]
    %v365 = vld [vmem:[#allocation8 + $0x9c] sm:$0xf]
    %v366 = vld [vmem:[#allocation8 + $0xa0] sm:$0xf]
    %v367 = vld [vmem:[#allocation8 + $0xa4] sm:$0xf]
    %v368 = vld [vmem:[#allocation8 + $0xa8] sm:$0xf]
    %v369 = vld [vmem:[#allocation8 + $0xac] sm:$0xf]
    %v370 = vld [vmem:[#allocation8 + $0xb0] sm:$0xf]
    %v371 = vld [vmem:[#allocation8 + $0xb4] sm:$0xf]
    %v372 = vld [vmem:[#allocation8 + $0xb8] sm:$0xf]
    %v373 = vld [vmem:[#allocation8 + $0xbc] sm:$0xf]
    %v374 = vld [vmem:[#allocation8 + $0xc0] sm:$0xf]
    %v375 = vld [vmem:[#allocation8 + $0xc4] sm:$0xf]
    %v376 = vld [vmem:[#allocation8 + $0xc8] sm:$0xf]
    %v377 = vld [vmem:[#allocation8 + $0xcc] sm:$0xf]
    %v378 = vld [vmem:[#allocation8 + $0xd0] sm:$0xf]
    %v379 = vld [vmem:[#allocation8 + $0xd4] sm:$0xf]
    %v380 = vld [vmem:[#allocation8 + $0xd8] sm:$0xf]
    %v381 = vld [vmem:[#allocation8 + $0xdc] sm:$0xf]
    %v382 = vld [vmem:[#allocation8 + $0xe0] sm:$0xf]
    %v383 = vld [vmem:[#allocation8 + $0xe4] sm:$0xf]
    %v384 = vld [vmem:[#allocation8 + $0xe8] sm:$0xf]
    %v385 = vld [vmem:[#allocation8 + $0xec] sm:$0xf]
    %v386 = vld [vmem:[#allocation8 + $0xf0] sm:$0xf]
    %v387 = vld [vmem:[#allocation8 + $0xf4] sm:$0xf]
    %v388 = vld [vmem:[#allocation8 + $0xf8] sm:$0xf]
    %v389 = vld [vmem:[#allocation8 + $0xfc] sm:$0xf]
    %v390 = vld [vmem:[#allocation8 + $0x100] sm:$0xf]
    %v391 = vld [vmem:[#allocation8 + $0x104] sm:$0xf]
    %v392 = vld [vmem:[#allocation8 + $0x108] sm:$0xf]
    %v393 = vld [vmem:[#allocation8 + $0x10c] sm:$0xf]
    %v394 = vld [vmem:[#allocation8 + $0x110] sm:$0xf]
    %v395 = vld [vmem:[#allocation8 + $0x114] sm:$0xf]
    %v396 = vld [vmem:[#allocation8 + $0x118] sm:$0xf]
    %v397 = vld [vmem:[#allocation8 + $0x11c] sm:$0xf]
    %v398 = vld [vmem:[#allocation8 + $0x120] sm:$0xf]
    %v399 = vld [vmem:[#allocation8 + $0x124] sm:$0xf]
    %v400 = vld [vmem:[#allocation8 + $0x128] sm:$0xf]
    %v401 = vld [vmem:[#allocation8 + $0x12c] sm:$0xf]
    %v402 = vld [vmem:[#allocation8 + $0x130] sm:$0xf]
    %v403 = vld [vmem:[#allocation8 + $0x134] sm:$0xf]
    %v404 = vld [vmem:[#allocation8 + $0x138] sm:$0xf]
    %v405 = vld [vmem:[#allocation8 + $0x13c] sm:$0xf]
    %v406 = vld [vmem:[#allocation8 + $0x140] sm:$0xf]
    %v407 = vld [vmem:[#allocation8 + $0x144] sm:$0xf]
    %v408 = vld [vmem:[#allocation8 + $0x148] sm:$0xf]
    %v409 = vld [vmem:[#allocation8 + $0x14c] sm:$0xf]
    %v410 = vld [vmem:[#allocation8 + $0x150] sm:$0xf]
    %v411 = vld [vmem:[#allocation8 + $0x154] sm:$0xf]
    %v412 = vld [vmem:[#allocation8 + $0x158] sm:$0xf]
    %v413 = vld [vmem:[#allocation8 + $0x15c] sm:$0xf]
    %v414 = vld [vmem:[#allocation8 + $0x160] sm:$0xf]
    %v415 = vld [vmem:[#allocation8 + $0x164] sm:$0xf]
    %v416 = vld [vmem:[#allocation8 + $0x168] sm:$0xf]
    %v417 = vld [vmem:[#allocation8 + $0x16c] sm:$0xf]
    %v418 = vld [vmem:[#allocation8 + $0x170] sm:$0xf]
    %v419 = vld [vmem:[#allocation8 + $0x174] sm:$0xf]
    %v420 = vld [vmem:[#allocation8 + $0x178] sm:$0xf]
    %v421 = vld [vmem:[#allocation8 + $0x17c] sm:$0xf]
    %v422 = vld [vmem:[#allocation8 + $0x180] sm:$0xf]
    %v423 = vld [vmem:[#allocation8 + $0x184] sm:$0xf]
    %v424 = vld [vmem:[#allocation8 + $0x188] sm:$0xf]
    %v425 = vld [vmem:[#allocation8 + $0x18c] sm:$0xf]
    %v426 = vld [vmem:[#allocation8 + $0x190] sm:$0xf]
    %v427 = vld [vmem:[#allocation8 + $0x194] sm:$0xf]
    %v428 = vld [vmem:[#allocation8 + $0x198] sm:$0xf]
    %v429 = vld [vmem:[#allocation8 + $0x19c] sm:$0xf]
    %v430 = vld [vmem:[#allocation8 + $0x1a0] sm:$0xf]
    %v431 = vld [vmem:[#allocation8 + $0x1a4] sm:$0xf]
    %v432 = vld [vmem:[#allocation8 + $0x1a8] sm:$0xf]
    %v433 = vld [vmem:[#allocation8 + $0x1ac] sm:$0xf]
    %v434 = vld [vmem:[#allocation8 + $0x1b0] sm:$0xf]
    %v435 = vld [vmem:[#allocation8 + $0x1b4] sm:$0xf]
    %v436 = vld [vmem:[#allocation8 + $0x1b8] sm:$0xf]
    %v437 = vld [vmem:[#allocation8 + $0x1bc] sm:$0xf]
    %v438 = vld [vmem:[#allocation8 + $0x1c0] sm:$0xf]
    %v439 = vld [vmem:[#allocation8 + $0x1c4] sm:$0xf]
    %v440 = vld [vmem:[#allocation8 + $0x1c8] sm:$0xf]
    %v441 = vld [vmem:[#allocation8 + $0x1cc] sm:$0xf]
    %v442 = vld [vmem:[#allocation8 + $0x1d0] sm:$0xf]
    %v443 = vld [vmem:[#allocation8 + $0x1d4] sm:$0xf]
    %v444 = vld [vmem:[#allocation8 + $0x1d8] sm:$0xf]
    %v445 = vld [vmem:[#allocation8 + $0x1dc] sm:$0xf]
    %v446 = vld [vmem:[#allocation8 + $0x1e0] sm:$0xf]
    %v447 = vld [vmem:[#allocation8 + $0x1e4] sm:$0xf]
    %v448 = vld [vmem:[#allocation8 + $0x1e8] sm:$0xf]
    %v449 = vld [vmem:[#allocation8 + $0x1ec] sm:$0xf]
    %v450 = vld [vmem:[#allocation8 + $0x1f0] sm:$0xf]
    %v451 = vld [vmem:[#allocation8 + $0x1f4] sm:$0xf]
    %v452 = vld [vmem:[#allocation8 + $0x1f8] sm:$0xf]
    %v453 = vld [vmem:[#allocation8 + $0x1fc] sm:$0xf]
    %v582 = vunpack.c.l.b16 %v326
    %v583 = vunpack.c.l.b16 %v327
    %v584 = vunpack.c.l.b16 %v328
    %v585 = vunpack.c.l.b16 %v329
    %v586 = vunpack.c.l.b16 %v330
    %v587 = vunpack.c.l.b16 %v331
    %v588 = vunpack.c.l.b16 %v332
    %v589 = vunpack.c.l.b16 %v333
    %v590 = vunpack.c.l.b16 %v334
    %v591 = vunpack.c.l.b16 %v335
    %v592 = vunpack.c.l.b16 %v336
    %v593 = vunpack.c.l.b16 %v337
    %v594 = vunpack.c.l.b16 %v338
    %v595 = vunpack.c.l.b16 %v339
    %v596 = vunpack.c.l.b16 %v340
    %v597 = vunpack.c.l.b16 %v341
    %v598 = vunpack.c.l.b16 %v342
    %v599 = vunpack.c.l.b16 %v343
    %v600 = vunpack.c.l.b16 %v344
    %v601 = vunpack.c.l.b16 %v345
    %v602 = vunpack.c.l.b16 %v346
    %v603 = vunpack.c.l.b16 %v347
    %v604 = vunpack.c.l.b16 %v348
    %v605 = vunpack.c.l.b16 %v349
    %v606 = vunpack.c.l.b16 %v350
    %v607 = vunpack.c.l.b16 %v351
    %v608 = vunpack.c.l.b16 %v352
    %v609 = vunpack.c.l.b16 %v353
    %v610 = vunpack.c.l.b16 %v354
    %v611 = vunpack.c.l.b16 %v355
    %v612 = vunpack.c.l.b16 %v356
    %v613 = vunpack.c.l.b16 %v357
    %v614 = vunpack.c.l.b16 %v358
    %v615 = vunpack.c.l.b16 %v359
    %v616 = vunpack.c.l.b16 %v360
    %v617 = vunpack.c.l.b16 %v361
    %v618 = vunpack.c.l.b16 %v362
    %v619 = vunpack.c.l.b16 %v363
    %v620 = vunpack.c.l.b16 %v364
    %v621 = vunpack.c.l.b16 %v365
    %v622 = vunpack.c.l.b16 %v366
    %v623 = vunpack.c.l.b16 %v367
    %v624 = vunpack.c.l.b16 %v368
    %v625 = vunpack.c.l.b16 %v369
    %v626 = vunpack.c.l.b16 %v370
    %v627 = vunpack.c.l.b16 %v371
    %v628 = vunpack.c.l.b16 %v372
    %v629 = vunpack.c.l.b16 %v373
    %v630 = vunpack.c.l.b16 %v374
    %v631 = vunpack.c.l.b16 %v375
    %v632 = vunpack.c.l.b16 %v376
    %v633 = vunpack.c.l.b16 %v377
    %v634 = vunpack.c.l.b16 %v378
    %v635 = vunpack.c.l.b16 %v379
    %v636 = vunpack.c.l.b16 %v380
    %v637 = vunpack.c.l.b16 %v381
    %v638 = vunpack.c.l.b16 %v382
    %v639 = vunpack.c.l.b16 %v383
    %v640 = vunpack.c.l.b16 %v384
    %v641 = vunpack.c.l.b16 %v385
    %v642 = vunpack.c.l.b16 %v386
    %v643 = vunpack.c.l.b16 %v387
    %v644 = vunpack.c.l.b16 %v388
    %v645 = vunpack.c.l.b16 %v389
    %v646 = vunpack.c.l.b16 %v390
    %v647 = vunpack.c.l.b16 %v391
    %v648 = vunpack.c.l.b16 %v392
    %v649 = vunpack.c.l.b16 %v393
    %v650 = vunpack.c.l.b16 %v394
    %v651 = vunpack.c.l.b16 %v395
    %v652 = vunpack.c.l.b16 %v396
    %v653 = vunpack.c.l.b16 %v397
    %v654 = vunpack.c.l.b16 %v398
    %v655 = vunpack.c.l.b16 %v399
    %v656 = vunpack.c.l.b16 %v400
    %v657 = vunpack.c.l.b16 %v401
    %v658 = vunpack.c.l.b16 %v402
    %v659 = vunpack.c.l.b16 %v403
    %v660 = vunpack.c.l.b16 %v404
    %v661 = vunpack.c.l.b16 %v405
    %v662 = vunpack.c.l.b16 %v406
    %v663 = vunpack.c.l.b16 %v407
    %v664 = vunpack.c.l.b16 %v408
    %v665 = vunpack.c.l.b16 %v409
    %v666 = vunpack.c.l.b16 %v410
    %v667 = vunpack.c.l.b16 %v411
    %v668 = vunpack.c.l.b16 %v412
    %v669 = vunpack.c.l.b16 %v413
    %v670 = vunpack.c.l.b16 %v414
    %v671 = vunpack.c.l.b16 %v415
    %v672 = vunpack.c.l.b16 %v416
    %v673 = vunpack.c.l.b16 %v417
    %v674 = vunpack.c.l.b16 %v418
    %v675 = vunpack.c.l.b16 %v419
    %v676 = vunpack.c.l.b16 %v420
    %v677 = vunpack.c.l.b16 %v421
    %v678 = vunpack.c.l.b16 %v422
    %v679 = vunpack.c.l.b16 %v423
    %v680 = vunpack.c.l.b16 %v424
    %v681 = vunpack.c.l.b16 %v425
    %v682 = vunpack.c.l.b16 %v426
    %v683 = vunpack.c.l.b16 %v427
    %v684 = vunpack.c.l.b16 %v428
    %v685 = vunpack.c.l.b16 %v429
    %v686 = vunpack.c.l.b16 %v430
    %v687 = vunpack.c.l.b16 %v431
    %v688 = vunpack.c.l.b16 %v432
    %v689 = vunpack.c.l.b16 %v433
    %v690 = vunpack.c.l.b16 %v434
    %v691 = vunpack.c.l.b16 %v435
    %v692 = vunpack.c.l.b16 %v436
    %v693 = vunpack.c.l.b16 %v437
    %v694 = vunpack.c.l.b16 %v438
    %v695 = vunpack.c.l.b16 %v439
    %v696 = vunpack.c.l.b16 %v440
    %v697 = vunpack.c.l.b16 %v441
    %v698 = vunpack.c.l.b16 %v442
    %v699 = vunpack.c.l.b16 %v443
    %v700 = vunpack.c.l.b16 %v444
    %v701 = vunpack.c.l.b16 %v445
    %v702 = vunpack.c.l.b16 %v446
    %v703 = vunpack.c.l.b16 %v447
    %v704 = vunpack.c.l.b16 %v448
    %v705 = vunpack.c.l.b16 %v449
    %v706 = vunpack.c.l.b16 %v450
    %v707 = vunpack.c.l.b16 %v451
    %v708 = vunpack.c.l.b16 %v452
    %v709 = vunpack.c.l.b16 %v453
    %v710 = vpack.c.b16 %v583, %v582
    %v711 = vpack.c.b16 %v585, %v584
    %v712 = vpack.c.b16 %v587, %v586
    %v713 = vpack.c.b16 %v589, %v588
    %v714 = vpack.c.b16 %v591, %v590
    %v715 = vpack.c.b16 %v593, %v592
    %v716 = vpack.c.b16 %v595, %v594
    %v717 = vpack.c.b16 %v597, %v596
    %v718 = vpack.c.b16 %v599, %v598
    %v719 = vpack.c.b16 %v601, %v600
    %v720 = vpack.c.b16 %v603, %v602
    %v721 = vpack.c.b16 %v605, %v604
    %v722 = vpack.c.b16 %v607, %v606
    %v723 = vpack.c.b16 %v609, %v608
    %v724 = vpack.c.b16 %v611, %v610
    %v725 = vpack.c.b16 %v613, %v612
    %v726 = vpack.c.b16 %v615, %v614
    %v727 = vpack.c.b16 %v617, %v616
    %v728 = vpack.c.b16 %v619, %v618
    %v729 = vpack.c.b16 %v621, %v620
    %v730 = vpack.c.b16 %v623, %v622
    %v731 = vpack.c.b16 %v625, %v624
    %v732 = vpack.c.b16 %v627, %v626
    %v733 = vpack.c.b16 %v629, %v628
    %v734 = vpack.c.b16 %v631, %v630
    %v735 = vpack.c.b16 %v633, %v632
    %v736 = vpack.c.b16 %v635, %v634
    %v737 = vpack.c.b16 %v637, %v636
    %v738 = vpack.c.b16 %v639, %v638
    %v739 = vpack.c.b16 %v641, %v640
    %v740 = vpack.c.b16 %v643, %v642
    %v741 = vpack.c.b16 %v645, %v644
    %v742 = vpack.c.b16 %v647, %v646
    %v743 = vpack.c.b16 %v649, %v648
    %v744 = vpack.c.b16 %v651, %v650
    %v745 = vpack.c.b16 %v653, %v652
    %v746 = vpack.c.b16 %v655, %v654
    %v747 = vpack.c.b16 %v657, %v656
    %v748 = vpack.c.b16 %v659, %v658
    %v749 = vpack.c.b16 %v661, %v660
    %v750 = vpack.c.b16 %v663, %v662
    %v751 = vpack.c.b16 %v665, %v664
    %v752 = vpack.c.b16 %v667, %v666
    %v753 = vpack.c.b16 %v669, %v668
    %v754 = vpack.c.b16 %v671, %v670
    %v755 = vpack.c.b16 %v673, %v672
    %v756 = vpack.c.b16 %v675, %v674
    %v757 = vpack.c.b16 %v677, %v676
    %v758 = vpack.c.b16 %v679, %v678
    %v759 = vpack.c.b16 %v681, %v680
    %v760 = vpack.c.b16 %v683, %v682
    %v761 = vpack.c.b16 %v685, %v684
    %v762 = vpack.c.b16 %v687, %v686
    %v763 = vpack.c.b16 %v689, %v688
    %v764 = vpack.c.b16 %v691, %v690
    %v765 = vpack.c.b16 %v693, %v692
    %v766 = vpack.c.b16 %v695, %v694
    %v767 = vpack.c.b16 %v697, %v696
    %v768 = vpack.c.b16 %v699, %v698
    %v769 = vpack.c.b16 %v701, %v700
    %v770 = vpack.c.b16 %v703, %v702
    %v771 = vpack.c.b16 %v705, %v704
    %v772 = vpack.c.b16 %v707, %v706
    %v773 = vpack.c.b16 %v709, %v708
    %838 = vmatpush.bf16.msra.mxu0 %v717
    %839 = vmatpush.bf16.msra.mxu0 %v716
    %840 = vmatpush.bf16.msra.mxu0 %v715
    %841 = vmatpush.bf16.msra.mxu0 %v714
    %842 = vmatpush.bf16.msra.mxu0 %v713
    %843 = vmatpush.bf16.msra.mxu0 %v712
    %844 = vmatpush.bf16.msra.mxu0 %v711
    %845 = vmatpush.bf16.msra.mxu0 %v710
    %846 = vmatmul.bf16.gmra.mxu0 %v190
    %v847 = vpop.f32.mrf.mxu0
    %v848 = vadd.f32 0.0, %v847
    %v849 = vpop.f32.mrf.mxu0
    %850 = vdwg.mxu0
    %851 = vmatpush.bf16.msra.mxu0 %v725
    %852 = vmatpush.bf16.msra.mxu0 %v724
    %853 = vmatpush.bf16.msra.mxu0 %v723
    %854 = vmatpush.bf16.msra.mxu0 %v722
    %855 = vmatpush.bf16.msra.mxu0 %v721
    %856 = vmatpush.bf16.msra.mxu0 %v720
    %857 = vmatpush.bf16.msra.mxu0 %v719
    %858 = vmatpush.bf16.msra.mxu0 %v718
    %859 = vmatmul.bf16.gmra.mxu0 %v191
    %v860 = vpop.f32.mrf.mxu0
    %v861 = vadd.f32 %v848, %v860
    %v862 = vpop.f32.mrf.mxu0
    %863 = vdwg.mxu0
    %864 = vmatpush.bf16.msra.mxu0 %v733
    %865 = vmatpush.bf16.msra.mxu0 %v732
    %866 = vmatpush.bf16.msra.mxu0 %v731
    %867 = vmatpush.bf16.msra.mxu0 %v730
    %868 = vmatpush.bf16.msra.mxu0 %v729
    %869 = vmatpush.bf16.msra.mxu0 %v728
    %870 = vmatpush.bf16.msra.mxu0 %v727
    %871 = vmatpush.bf16.msra.mxu0 %v726
    %872 = vmatmul.bf16.gmra.mxu0 %v192
    %v873 = vpop.f32.mrf.mxu0
    %v874 = vadd.f32 %v861, %v873
    %v875 = vpop.f32.mrf.mxu0
    %876 = vdwg.mxu0
    %877 = vmatpush.bf16.msra.mxu0 %v741
    %878 = vmatpush.bf16.msra.mxu0 %v740
    %879 = vmatpush.bf16.msra.mxu0 %v739
    %880 = vmatpush.bf16.msra.mxu0 %v738
    %881 = vmatpush.bf16.msra.mxu0 %v737
    %882 = vmatpush.bf16.msra.mxu0 %v736
    %883 = vmatpush.bf16.msra.mxu0 %v735
    %884 = vmatpush.bf16.msra.mxu0 %v734
    %885 = vmatmul.bf16.gmra.mxu0 %v193
    %v886 = vpop.f32.mrf.mxu0
    %v887 = vadd.f32 %v874, %v886
    %v888 = vpop.f32.mrf.mxu0
    %889 = vdwg.mxu0
    %890 = vmatpush.bf16.msra.mxu0 %v749
    %891 = vmatpush.bf16.msra.mxu0 %v748
    %892 = vmatpush.bf16.msra.mxu0 %v747
    %893 = vmatpush.bf16.msra.mxu0 %v746
    %894 = vmatpush.bf16.msra.mxu0 %v745
    %895 = vmatpush.bf16.msra.mxu0 %v744
    %896 = vmatpush.bf16.msra.mxu0 %v743
    %897 = vmatpush.bf16.msra.mxu0 %v742
    %898 = vmatmul.bf16.gmra.mxu0 %v194
    %v899 = vpop.f32.mrf.mxu0
    %v900 = vadd.f32 %v887, %v899
    %v901 = vpop.f32.mrf.mxu0
    %902 = vdwg.mxu0
    %903 = vmatpush.bf16.msra.mxu0 %v757
    %904 = vmatpush.bf16.msra.mxu0 %v756
    %905 = vmatpush.bf16.msra.mxu0 %v755
    %906 = vmatpush.bf16.msra.mxu0 %v754
    %907 = vmatpush.bf16.msra.mxu0 %v753
    %908 = vmatpush.bf16.msra.mxu0 %v752
    %909 = vmatpush.bf16.msra.mxu0 %v751
    %910 = vmatpush.bf16.msra.mxu0 %v750
    %911 = vmatmul.bf16.gmra.mxu0 %v195
    %v912 = vpop.f32.mrf.mxu0
    %v913 = vadd.f32 %v900, %v912
    %v914 = vpop.f32.mrf.mxu0
    %915 = vdwg.mxu0
    %916 = vmatpush.bf16.msra.mxu0 %v765
    %917 = vmatpush.bf16.msra.mxu0 %v764
    %918 = vmatpush.bf16.msra.mxu0 %v763
    %919 = vmatpush.bf16.msra.mxu0 %v762
    %920 = vmatpush.bf16.msra.mxu0 %v761
    %921 = vmatpush.bf16.msra.mxu0 %v760
    %922 = vmatpush.bf16.msra.mxu0 %v759
    %923 = vmatpush.bf16.msra.mxu0 %v758
    %924 = vmatmul.bf16.gmra.mxu0 %v196
    %v925 = vpop.f32.mrf.mxu0
    %v926 = vadd.f32 %v913, %v925
    %v927 = vpop.f32.mrf.mxu0
    %928 = vdwg.mxu0
    %929 = vmatpush.bf16.msra.mxu0 %v773
    %930 = vmatpush.bf16.msra.mxu0 %v772
    %931 = vmatpush.bf16.msra.mxu0 %v771
    %932 = vmatpush.bf16.msra.mxu0 %v770
    %933 = vmatpush.bf16.msra.mxu0 %v769
    %934 = vmatpush.bf16.msra.mxu0 %v768
    %935 = vmatpush.bf16.msra.mxu0 %v767
    %936 = vmatpush.bf16.msra.mxu0 %v766
    %937 = vmatmul.bf16.gmra.mxu0 %v197
    %v938 = vpop.f32.mrf.mxu0
    %v939 = vadd.f32 %v926, %v938
    %v940 = vpop.f32.mrf.mxu0
    %941 = vdwg.mxu0
    %v1070 = vunpack.c.l.b16 %v198
    %v1071 = vunpack.c.l.b16 %v199
    %v1072 = vunpack.c.l.b16 %v200
    %v1073 = vunpack.c.l.b16 %v201
    %v1074 = vunpack.c.l.b16 %v202
    %v1075 = vunpack.c.l.b16 %v203
    %v1076 = vunpack.c.l.b16 %v204
    %v1077 = vunpack.c.l.b16 %v205
    %v1078 = vunpack.c.l.b16 %v206
    %v1079 = vunpack.c.l.b16 %v207
    %v1080 = vunpack.c.l.b16 %v208
    %v1081 = vunpack.c.l.b16 %v209
    %v1082 = vunpack.c.l.b16 %v210
    %v1083 = vunpack.c.l.b16 %v211
    %v1084 = vunpack.c.l.b16 %v212
    %v1085 = vunpack.c.l.b16 %v213
    %v1086 = vunpack.c.l.b16 %v214
    %v1087 = vunpack.c.l.b16 %v215
    %v1088 = vunpack.c.l.b16 %v216
    %v1089 = vunpack.c.l.b16 %v217
    %v1090 = vunpack.c.l.b16 %v218
    %v1091 = vunpack.c.l.b16 %v219
    %v1092 = vunpack.c.l.b16 %v220
    %v1093 = vunpack.c.l.b16 %v221
    %v1094 = vunpack.c.l.b16 %v222
    %v1095 = vunpack.c.l.b16 %v223
    %v1096 = vunpack.c.l.b16 %v224
    %v1097 = vunpack.c.l.b16 %v225
    %v1098 = vunpack.c.l.b16 %v226
    %v1099 = vunpack.c.l.b16 %v227
    %v1100 = vunpack.c.l.b16 %v228
    %v1101 = vunpack.c.l.b16 %v229
    %v1102 = vunpack.c.l.b16 %v230
    %v1103 = vunpack.c.l.b16 %v231
    %v1104 = vunpack.c.l.b16 %v232
    %v1105 = vunpack.c.l.b16 %v233
    %v1106 = vunpack.c.l.b16 %v234
    %v1107 = vunpack.c.l.b16 %v235
    %v1108 = vunpack.c.l.b16 %v236
    %v1109 = vunpack.c.l.b16 %v237
    %v1110 = vunpack.c.l.b16 %v238
    %v1111 = vunpack.c.l.b16 %v239
    %v1112 = vunpack.c.l.b16 %v240
    %v1113 = vunpack.c.l.b16 %v241
    %v1114 = vunpack.c.l.b16 %v242
    %v1115 = vunpack.c.l.b16 %v243
    %v1116 = vunpack.c.l.b16 %v244
    %v1117 = vunpack.c.l.b16 %v245
    %v1118 = vunpack.c.l.b16 %v246
    %v1119 = vunpack.c.l.b16 %v247
    %v1120 = vunpack.c.l.b16 %v248
    %v1121 = vunpack.c.l.b16 %v249
    %v1122 = vunpack.c.l.b16 %v250
    %v1123 = vunpack.c.l.b16 %v251
    %v1124 = vunpack.c.l.b16 %v252
    %v1125 = vunpack.c.l.b16 %v253
    %v1126 = vunpack.c.l.b16 %v254
    %v1127 = vunpack.c.l.b16 %v255
    %v1128 = vunpack.c.l.b16 %v256
    %v1129 = vunpack.c.l.b16 %v257
    %v1130 = vunpack.c.l.b16 %v258
    %v1131 = vunpack.c.l.b16 %v259
    %v1132 = vunpack.c.l.b16 %v260
    %v1133 = vunpack.c.l.b16 %v261
    %v1134 = vunpack.c.l.b16 %v262
    %v1135 = vunpack.c.l.b16 %v263
    %v1136 = vunpack.c.l.b16 %v264
    %v1137 = vunpack.c.l.b16 %v265
    %v1138 = vunpack.c.l.b16 %v266
    %v1139 = vunpack.c.l.b16 %v267
    %v1140 = vunpack.c.l.b16 %v268
    %v1141 = vunpack.c.l.b16 %v269
    %v1142 = vunpack.c.l.b16 %v270
    %v1143 = vunpack.c.l.b16 %v271
    %v1144 = vunpack.c.l.b16 %v272
    %v1145 = vunpack.c.l.b16 %v273
    %v1146 = vunpack.c.l.b16 %v274
    %v1147 = vunpack.c.l.b16 %v275
    %v1148 = vunpack.c.l.b16 %v276
    %v1149 = vunpack.c.l.b16 %v277
    %v1150 = vunpack.c.l.b16 %v278
    %v1151 = vunpack.c.l.b16 %v279
    %v1152 = vunpack.c.l.b16 %v280
    %v1153 = vunpack.c.l.b16 %v281
    %v1154 = vunpack.c.l.b16 %v282
    %v1155 = vunpack.c.l.b16 %v283
    %v1156 = vunpack.c.l.b16 %v284
    %v1157 = vunpack.c.l.b16 %v285
    %v1158 = vunpack.c.l.b16 %v286
    %v1159 = vunpack.c.l.b16 %v287
    %v1160 = vunpack.c.l.b16 %v288
    %v1161 = vunpack.c.l.b16 %v289
    %v1162 = vunpack.c.l.b16 %v290
    %v1163 = vunpack.c.l.b16 %v291
    %v1164 = vunpack.c.l.b16 %v292
    %v1165 = vunpack.c.l.b16 %v293
    %v1166 = vunpack.c.l.b16 %v294
    %v1167 = vunpack.c.l.b16 %v295
    %v1168 = vunpack.c.l.b16 %v296
    %v1169 = vunpack.c.l.b16 %v297
    %v1170 = vunpack.c.l.b16 %v298
    %v1171 = vunpack.c.l.b16 %v299
    %v1172 = vunpack.c.l.b16 %v300
    %v1173 = vunpack.c.l.b16 %v301
    %v1174 = vunpack.c.l.b16 %v302
    %v1175 = vunpack.c.l.b16 %v303
    %v1176 = vunpack.c.l.b16 %v304
    %v1177 = vunpack.c.l.b16 %v305
    %v1178 = vunpack.c.l.b16 %v306
    %v1179 = vunpack.c.l.b16 %v307
    %v1180 = vunpack.c.l.b16 %v308
    %v1181 = vunpack.c.l.b16 %v309
    %v1182 = vunpack.c.l.b16 %v310
    %v1183 = vunpack.c.l.b16 %v311
    %v1184 = vunpack.c.l.b16 %v312
    %v1185 = vunpack.c.l.b16 %v313
    %v1186 = vunpack.c.l.b16 %v314
    %v1187 = vunpack.c.l.b16 %v315
    %v1188 = vunpack.c.l.b16 %v316
    %v1189 = vunpack.c.l.b16 %v317
    %v1190 = vunpack.c.l.b16 %v318
    %v1191 = vunpack.c.l.b16 %v319
    %v1192 = vunpack.c.l.b16 %v320
    %v1193 = vunpack.c.l.b16 %v321
    %v1194 = vunpack.c.l.b16 %v322
    %v1195 = vunpack.c.l.b16 %v323
    %v1196 = vunpack.c.l.b16 %v324
    %v1197 = vunpack.c.l.b16 %v325
    %v1198 = vpack.c.b16 %v1071, %v1070
    %v1199 = vpack.c.b16 %v1073, %v1072
    %v1200 = vpack.c.b16 %v1075, %v1074
    %v1201 = vpack.c.b16 %v1077, %v1076
    %v1202 = vpack.c.b16 %v1079, %v1078
    %v1203 = vpack.c.b16 %v1081, %v1080
    %v1204 = vpack.c.b16 %v1083, %v1082
    %v1205 = vpack.c.b16 %v1085, %v1084
    %v1206 = vpack.c.b16 %v1087, %v1086
    %v1207 = vpack.c.b16 %v1089, %v1088
    %v1208 = vpack.c.b16 %v1091, %v1090
    %v1209 = vpack.c.b16 %v1093, %v1092
    %v1210 = vpack.c.b16 %v1095, %v1094
    %v1211 = vpack.c.b16 %v1097, %v1096
    %v1212 = vpack.c.b16 %v1099, %v1098
    %v1213 = vpack.c.b16 %v1101, %v1100
    %v1214 = vpack.c.b16 %v1103, %v1102
    %v1215 = vpack.c.b16 %v1105, %v1104
    %v1216 = vpack.c.b16 %v1107, %v1106
    %v1217 = vpack.c.b16 %v1109, %v1108
    %v1218 = vpack.c.b16 %v1111, %v1110
    %v1219 = vpack.c.b16 %v1113, %v1112
    %v1220 = vpack.c.b16 %v1115, %v1114
    %v1221 = vpack.c.b16 %v1117, %v1116
    %v1222 = vpack.c.b16 %v1119, %v1118
    %v1223 = vpack.c.b16 %v1121, %v1120
    %v1224 = vpack.c.b16 %v1123, %v1122
    %v1225 = vpack.c.b16 %v1125, %v1124
    %v1226 = vpack.c.b16 %v1127, %v1126
    %v1227 = vpack.c.b16 %v1129, %v1128
    %v1228 = vpack.c.b16 %v1131, %v1130
    %v1229 = vpack.c.b16 %v1133, %v1132
    %v1230 = vpack.c.b16 %v1135, %v1134
    %v1231 = vpack.c.b16 %v1137, %v1136
    %v1232 = vpack.c.b16 %v1139, %v1138
    %v1233 = vpack.c.b16 %v1141, %v1140
    %v1234 = vpack.c.b16 %v1143, %v1142
    %v1235 = vpack.c.b16 %v1145, %v1144
    %v1236 = vpack.c.b16 %v1147, %v1146
    %v1237 = vpack.c.b16 %v1149, %v1148
    %v1238 = vpack.c.b16 %v1151, %v1150
    %v1239 = vpack.c.b16 %v1153, %v1152
    %v1240 = vpack.c.b16 %v1155, %v1154
    %v1241 = vpack.c.b16 %v1157, %v1156
    %v1242 = vpack.c.b16 %v1159, %v1158
    %v1243 = vpack.c.b16 %v1161, %v1160
    %v1244 = vpack.c.b16 %v1163, %v1162
    %v1245 = vpack.c.b16 %v1165, %v1164
    %v1246 = vpack.c.b16 %v1167, %v1166
    %v1247 = vpack.c.b16 %v1169, %v1168
    %v1248 = vpack.c.b16 %v1171, %v1170
    %v1249 = vpack.c.b16 %v1173, %v1172
    %v1250 = vpack.c.b16 %v1175, %v1174
    %v1251 = vpack.c.b16 %v1177, %v1176
    %v1252 = vpack.c.b16 %v1179, %v1178
    %v1253 = vpack.c.b16 %v1181, %v1180
    %v1254 = vpack.c.b16 %v1183, %v1182
    %v1255 = vpack.c.b16 %v1185, %v1184
    %v1256 = vpack.c.b16 %v1187, %v1186
    %v1257 = vpack.c.b16 %v1189, %v1188
    %v1258 = vpack.c.b16 %v1191, %v1190
    %v1259 = vpack.c.b16 %v1193, %v1192
    %v1260 = vpack.c.b16 %v1195, %v1194
    %v1261 = vpack.c.b16 %v1197, %v1196
    %1326 = vmatpush.bf16.msra.mxu0 %v1205
    %1327 = vmatpush.bf16.msra.mxu0 %v1204
    %1328 = vmatpush.bf16.msra.mxu0 %v1203
    %1329 = vmatpush.bf16.msra.mxu0 %v1202
    %1330 = vmatpush.bf16.msra.mxu0 %v1201
    %1331 = vmatpush.bf16.msra.mxu0 %v1200
    %1332 = vmatpush.bf16.msra.mxu0 %v1199
    %1333 = vmatpush.bf16.msra.mxu0 %v1198
    %1334 = vmatmul.bf16.gmra.mxu0 %v159
    %v1335 = vpop.f32.mrf.mxu0
    %v1336 = vadd.f32 %v939, %v1335
    %v1337 = vpop.f32.mrf.mxu0
    %1338 = vdwg.mxu0
    %1339 = vmatpush.bf16.msra.mxu0 %v1213
    %1340 = vmatpush.bf16.msra.mxu0 %v1212
    %1341 = vmatpush.bf16.msra.mxu0 %v1211
    %1342 = vmatpush.bf16.msra.mxu0 %v1210
    %1343 = vmatpush.bf16.msra.mxu0 %v1209
    %1344 = vmatpush.bf16.msra.mxu0 %v1208
    %1345 = vmatpush.bf16.msra.mxu0 %v1207
    %1346 = vmatpush.bf16.msra.mxu0 %v1206
    %1347 = vmatmul.bf16.gmra.mxu0 %v160
    %v1348 = vpop.f32.mrf.mxu0
    %v1349 = vadd.f32 %v1336, %v1348
    %v1350 = vpop.f32.mrf.mxu0
    %1351 = vdwg.mxu0
    %1352 = vmatpush.bf16.msra.mxu0 %v1221
    %1353 = vmatpush.bf16.msra.mxu0 %v1220
    %1354 = vmatpush.bf16.msra.mxu0 %v1219
    %1355 = vmatpush.bf16.msra.mxu0 %v1218
    %1356 = vmatpush.bf16.msra.mxu0 %v1217
    %1357 = vmatpush.bf16.msra.mxu0 %v1216
    %1358 = vmatpush.bf16.msra.mxu0 %v1215
    %1359 = vmatpush.bf16.msra.mxu0 %v1214
    %1360 = vmatmul.bf16.gmra.mxu0 %v161
    %v1361 = vpop.f32.mrf.mxu0
    %v1362 = vadd.f32 %v1349, %v1361
    %v1363 = vpop.f32.mrf.mxu0
    %1364 = vdwg.mxu0
    %1365 = vmatpush.bf16.msra.mxu0 %v1229
    %1366 = vmatpush.bf16.msra.mxu0 %v1228
    %1367 = vmatpush.bf16.msra.mxu0 %v1227
    %1368 = vmatpush.bf16.msra.mxu0 %v1226
    %1369 = vmatpush.bf16.msra.mxu0 %v1225
    %1370 = vmatpush.bf16.msra.mxu0 %v1224
    %1371 = vmatpush.bf16.msra.mxu0 %v1223
    %1372 = vmatpush.bf16.msra.mxu0 %v1222
    %1373 = vmatmul.bf16.gmra.mxu0 %v162
    %v1374 = vpop.f32.mrf.mxu0
    %v1375 = vadd.f32 %v1362, %v1374
    %v1376 = vpop.f32.mrf.mxu0
    %1377 = vdwg.mxu0
    %1378 = vmatpush.bf16.msra.mxu0 %v1237
    %1379 = vmatpush.bf16.msra.mxu0 %v1236
    %1380 = vmatpush.bf16.msra.mxu0 %v1235
    %1381 = vmatpush.bf16.msra.mxu0 %v1234
    %1382 = vmatpush.bf16.msra.mxu0 %v1233
    %1383 = vmatpush.bf16.msra.mxu0 %v1232
    %1384 = vmatpush.bf16.msra.mxu0 %v1231
    %1385 = vmatpush.bf16.msra.mxu0 %v1230
    %1386 = vmatmul.bf16.gmra.mxu0 %v163
    %v1387 = vpop.f32.mrf.mxu0
    %v1388 = vadd.f32 %v1375, %v1387
    %v1389 = vpop.f32.mrf.mxu0
    %1390 = vdwg.mxu0
    %1391 = vmatpush.bf16.msra.mxu0 %v1245
    %1392 = vmatpush.bf16.msra.mxu0 %v1244
    %1393 = vmatpush.bf16.msra.mxu0 %v1243
    %1394 = vmatpush.bf16.msra.mxu0 %v1242
    %1395 = vmatpush.bf16.msra.mxu0 %v1241
    %1396 = vmatpush.bf16.msra.mxu0 %v1240
    %1397 = vmatpush.bf16.msra.mxu0 %v1239
    %1398 = vmatpush.bf16.msra.mxu0 %v1238
    %1399 = vmatmul.bf16.gmra.mxu0 %v164
    %v1400 = vpop.f32.mrf.mxu0
    %v1401 = vadd.f32 %v1388, %v1400
    %v1402 = vpop.f32.mrf.mxu0
    %1403 = vdwg.mxu0
    %1404 = vmatpush.bf16.msra.mxu0 %v1253
    %1405 = vmatpush.bf16.msra.mxu0 %v1252
    %1406 = vmatpush.bf16.msra.mxu0 %v1251
    %1407 = vmatpush.bf16.msra.mxu0 %v1250
    %1408 = vmatpush.bf16.msra.mxu0 %v1249
    %1409 = vmatpush.bf16.msra.mxu0 %v1248
    %1410 = vmatpush.bf16.msra.mxu0 %v1247
    %1411 = vmatpush.bf16.msra.mxu0 %v1246
    %1412 = vmatmul.bf16.gmra.mxu0 %v165
    %v1413 = vpop.f32.mrf.mxu0
    %v1414 = vadd.f32 %v1401, %v1413
    %v1415 = vpop.f32.mrf.mxu0
    %1416 = vdwg.mxu0
    %1417 = vmatpush.bf16.msra.mxu0 %v1261
    %1418 = vmatpush.bf16.msra.mxu0 %v1260
    %1419 = vmatpush.bf16.msra.mxu0 %v1259
    %1420 = vmatpush.bf16.msra.mxu0 %v1258
    %1421 = vmatpush.bf16.msra.mxu0 %v1257
    %1422 = vmatpush.bf16.msra.mxu0 %v1256
    %1423 = vmatpush.bf16.msra.mxu0 %v1255
    %1424 = vmatpush.bf16.msra.mxu0 %v1254
    %1425 = vmatmul.bf16.gmra.mxu0 %v166
    %v1426 = vpop.f32.mrf.mxu0
    %v1427 = vadd.f32 %v1414, %v1426
    %v1428 = vpop.f32.mrf.mxu0
    %1429 = vdwg.mxu0
    %v1430 = vld [vmem:[%s4] sm:$0x1]
    %v1432 = vperm.slane %v1430, 0
    %v1434 = vadd.f32 %v1427, %v1432
    %v1435 = vmax.f32 %v1434, 0.0
    %v1436 = vpack.c.bf16 %v1435, %v1435
    %v1437 = vld [vmem:[#allocation10] sm:$0xf]
    %v1438 = vld [vmem:[#allocation10 + $0x4] sm:$0xf]
    %v1439 = vld [vmem:[#allocation10 + $0x8] sm:$0xf]
    %v1440 = vld [vmem:[#allocation10 + $0xc] sm:$0xf]
    %v1441 = vld [vmem:[#allocation10 + $0x10] sm:$0xf]
    %v1442 = vld [vmem:[#allocation10 + $0x14] sm:$0xf]
    %v1443 = vld [vmem:[#allocation10 + $0x18] sm:$0xf]
    %v1444 = vld [vmem:[#allocation10 + $0x1c] sm:$0xf]
    %v1445 = vld [vmem:[#allocation10 + $0x20] sm:$0xf]
    %v1446 = vld [vmem:[#allocation10 + $0x24] sm:$0xf]
    %v1447 = vld [vmem:[#allocation10 + $0x28] sm:$0xf]
    %v1448 = vld [vmem:[#allocation10 + $0x2c] sm:$0xf]
    %v1449 = vld [vmem:[#allocation10 + $0x30] sm:$0xf]
    %v1450 = vld [vmem:[#allocation10 + $0x34] sm:$0xf]
    %v1451 = vld [vmem:[#allocation10 + $0x38] sm:$0xf]
    %v1452 = vld [vmem:[#allocation10 + $0x3c] sm:$0xf]
    %v1453 = vld [vmem:[%s6] sm:$0x1]
    %v1455 = vperm.slane %v1453, 0
    %v1473 = vunpack.c.l.b16 %v1437
    %v1474 = vunpack.c.l.b16 %v1438
    %v1475 = vunpack.c.l.b16 %v1439
    %v1476 = vunpack.c.l.b16 %v1440
    %v1477 = vunpack.c.l.b16 %v1441
    %v1478 = vunpack.c.l.b16 %v1442
    %v1479 = vunpack.c.l.b16 %v1443
    %v1480 = vunpack.c.l.b16 %v1444
    %v1481 = vunpack.c.l.b16 %v1445
    %v1482 = vunpack.c.l.b16 %v1446
    %v1483 = vunpack.c.l.b16 %v1447
    %v1484 = vunpack.c.l.b16 %v1448
    %v1485 = vunpack.c.l.b16 %v1449
    %v1486 = vunpack.c.l.b16 %v1450
    %v1487 = vunpack.c.l.b16 %v1451
    %v1488 = vunpack.c.l.b16 %v1452
    %v1489 = vpack.c.b16 %v1474, %v1473
    %v1490 = vpack.c.b16 %v1476, %v1475
    %v1491 = vpack.c.b16 %v1478, %v1477
    %v1492 = vpack.c.b16 %v1480, %v1479
    %v1493 = vpack.c.b16 %v1482, %v1481
    %v1494 = vpack.c.b16 %v1484, %v1483
    %v1495 = vpack.c.b16 %v1486, %v1485
    %v1496 = vpack.c.b16 %v1488, %v1487
    %1505 = vmatpush.bf16.msra.mxu0 %v1496
    %1506 = vmatpush.bf16.msra.mxu0 %v1495
    %1507 = vmatpush.bf16.msra.mxu0 %v1494
    %1508 = vmatpush.bf16.msra.mxu0 %v1493
    %1509 = vmatpush.bf16.msra.mxu0 %v1492
    %1510 = vmatpush.bf16.msra.mxu0 %v1491
    %1511 = vmatpush.bf16.msra.mxu0 %v1490
    %1512 = vmatpush.bf16.msra.mxu0 %v1489
    %1513 = vmatmul.bf16.gmra.mxu0 %v1436
    %v1514 = vpop.f32.mrf.mxu0
    %v1515 = vadd.f32 %v1455, %v1514
    %v1516 = vpop.f32.mrf.mxu0
    %1517 = vdwg.mxu0
    %v1518 = vmax.f32 %v1515, 0.0
    %v1519 = vpack.c.bf16 %v1518, %v1518
    %v1520 = vld [vmem:[#allocation11] sm:$0xff]
    %v1521 = vld [vmem:[#allocation11 + $0x8] sm:$0xff]
    %v1522 = vld [vmem:[#allocation11 + $0x10] sm:$0xff]
    %v1523 = vld [vmem:[#allocation11 + $0x18] sm:$0xff]
    %v1524 = vld [vmem:[#allocation11 + $0x20] sm:$0xff]
    %v1525 = vld [vmem:[#allocation11 + $0x28] sm:$0xff]
    %v1526 = vld [vmem:[#allocation11 + $0x30] sm:$0xff]
    %v1527 = vld [vmem:[#allocation11 + $0x38] sm:$0xff]
    %v1528 = vld [vmem:[#allocation11 + $0x40] sm:$0xff]
    %v1529 = vld [vmem:[#allocation11 + $0x48] sm:$0xff]
    %v1530 = vld [vmem:[#allocation11 + $0x50] sm:$0xff]
    %v1531 = vld [vmem:[#allocation11 + $0x58] sm:$0xff]
    %v1532 = vld [vmem:[#allocation11 + $0x60] sm:$0xff]
    %v1533 = vld [vmem:[#allocation11 + $0x68] sm:$0xff]
    %v1534 = vld [vmem:[#allocation11 + $0x70] sm:$0xff]
    %v1535 = vld [vmem:[#allocation11 + $0x78] sm:$0xff]
    %v1536 = vld [vmem:[#allocation11 + $0x80] sm:$0xff]
    %v1537 = vld [vmem:[#allocation11 + $0x88] sm:$0xff]
    %v1538 = vld [vmem:[#allocation11 + $0x90] sm:$0xff]
    %v1539 = vld [vmem:[#allocation11 + $0x98] sm:$0xff]
    %v1540 = vld [vmem:[#allocation11 + $0xa0] sm:$0xff]
    %v1541 = vld [vmem:[#allocation11 + $0xa8] sm:$0xff]
    %v1542 = vld [vmem:[#allocation11 + $0xb0] sm:$0xff]
    %v1543 = vld [vmem:[#allocation11 + $0xb8] sm:$0xff]
    %v1544 = vld [vmem:[#allocation11 + $0xc0] sm:$0xff]
    %v1545 = vld [vmem:[#allocation11 + $0xc8] sm:$0xff]
    %v1546 = vld [vmem:[#allocation11 + $0xd0] sm:$0xff]
    %v1547 = vld [vmem:[#allocation11 + $0xd8] sm:$0xff]
    %v1548 = vld [vmem:[#allocation11 + $0xe0] sm:$0xff]
    %v1549 = vld [vmem:[#allocation11 + $0xe8] sm:$0xff]
    %v1550 = vld [vmem:[#allocation11 + $0xf0] sm:$0xff]
    %v1551 = vld [vmem:[#allocation11 + $0xf8] sm:$0xff]
    %v1552 = vld [vmem:[#allocation11 + $0x100] sm:$0xff]
    %v1553 = vld [vmem:[#allocation11 + $0x108] sm:$0xff]
    %v1554 = vld [vmem:[#allocation11 + $0x110] sm:$0xff]
    %v1555 = vld [vmem:[#allocation11 + $0x118] sm:$0xff]
    %v1556 = vld [vmem:[#allocation11 + $0x120] sm:$0xff]
    %v1557 = vld [vmem:[#allocation11 + $0x128] sm:$0xff]
    %v1558 = vld [vmem:[#allocation11 + $0x130] sm:$0xff]
    %v1559 = vld [vmem:[#allocation11 + $0x138] sm:$0xff]
    %v1560 = vld [vmem:[#allocation11 + $0x140] sm:$0xff]
    %v1561 = vld [vmem:[#allocation11 + $0x148] sm:$0xff]
    %v1562 = vld [vmem:[#allocation11 + $0x150] sm:$0xff]
    %v1563 = vld [vmem:[#allocation11 + $0x158] sm:$0xff]
    %v1564 = vld [vmem:[#allocation11 + $0x160] sm:$0xff]
    %v1565 = vld [vmem:[#allocation11 + $0x168] sm:$0xff]
    %v1566 = vld [vmem:[#allocation11 + $0x170] sm:$0xff]
    %v1567 = vld [vmem:[#allocation11 + $0x178] sm:$0xff]
    %v1568 = vld [vmem:[#allocation11 + $0x180] sm:$0xff]
    %v1569 = vld [vmem:[#allocation11 + $0x188] sm:$0xff]
    %v1570 = vld [vmem:[#allocation11 + $0x190] sm:$0xff]
    %v1571 = vld [vmem:[#allocation11 + $0x198] sm:$0xff]
    %v1572 = vld [vmem:[#allocation11 + $0x1a0] sm:$0xff]
    %v1573 = vld [vmem:[#allocation11 + $0x1a8] sm:$0xff]
    %v1574 = vld [vmem:[#allocation11 + $0x1b0] sm:$0xff]
    %v1575 = vld [vmem:[#allocation11 + $0x1b8] sm:$0xff]
    %v1576 = vld [vmem:[#allocation11 + $0x1c0] sm:$0xff]
    %v1577 = vld [vmem:[#allocation11 + $0x1c8] sm:$0xff]
    %v1578 = vld [vmem:[#allocation11 + $0x1d0] sm:$0xff]
    %v1579 = vld [vmem:[#allocation11 + $0x1d8] sm:$0xff]
    %v1580 = vld [vmem:[#allocation11 + $0x1e0] sm:$0xff]
    %v1581 = vld [vmem:[#allocation11 + $0x1e8] sm:$0xff]
    %v1582 = vld [vmem:[#allocation11 + $0x1f0] sm:$0xff]
    %v1583 = vld [vmem:[#allocation11 + $0x1f8] sm:$0xff]
    %v1584 = vld [vmem:[#allocation13] sm:$0xff]
    %v1586 = vperm.slane %v1584, 0
    %v1587 = vperm.slane %v1584, 1
    %v1588 = vperm.slane %v1584, 2
    %v1589 = vperm.slane %v1584, 3
    %v1590 = vperm.slane %v1584, 4
    %v1591 = vperm.slane %v1584, 5
    %v1592 = vperm.slane %v1584, 6
    %v1593 = vperm.slane %v1584, 7
    %v1666 = vunpack.c.l.b16 %v1520
    %v1667 = vunpack.c.h.b16 %v1520
    %v1668 = vunpack.c.l.b16 %v1521
    %v1669 = vunpack.c.h.b16 %v1521
    %v1670 = vunpack.c.l.b16 %v1522
    %v1671 = vunpack.c.h.b16 %v1522
    %v1672 = vunpack.c.l.b16 %v1523
    %v1673 = vunpack.c.h.b16 %v1523
    %v1674 = vunpack.c.l.b16 %v1524
    %v1675 = vunpack.c.h.b16 %v1524
    %v1676 = vunpack.c.l.b16 %v1525
    %v1677 = vunpack.c.h.b16 %v1525
    %v1678 = vunpack.c.l.b16 %v1526
    %v1679 = vunpack.c.h.b16 %v1526
    %v1680 = vunpack.c.l.b16 %v1527
    %v1681 = vunpack.c.h.b16 %v1527
    %v1682 = vunpack.c.l.b16 %v1528
    %v1683 = vunpack.c.h.b16 %v1528
    %v1684 = vunpack.c.l.b16 %v1529
    %v1685 = vunpack.c.h.b16 %v1529
    %v1686 = vunpack.c.l.b16 %v1530
    %v1687 = vunpack.c.h.b16 %v1530
    %v1688 = vunpack.c.l.b16 %v1531
    %v1689 = vunpack.c.h.b16 %v1531
    %v1690 = vunpack.c.l.b16 %v1532
    %v1691 = vunpack.c.h.b16 %v1532
    %v1692 = vunpack.c.l.b16 %v1533
    %v1693 = vunpack.c.h.b16 %v1533
    %v1694 = vunpack.c.l.b16 %v1534
    %v1695 = vunpack.c.h.b16 %v1534
    %v1696 = vunpack.c.l.b16 %v1535
    %v1697 = vunpack.c.h.b16 %v1535
    %v1698 = vunpack.c.l.b16 %v1536
    %v1699 = vunpack.c.h.b16 %v1536
    %v1700 = vunpack.c.l.b16 %v1537
    %v1701 = vunpack.c.h.b16 %v1537
    %v1702 = vunpack.c.l.b16 %v1538
    %v1703 = vunpack.c.h.b16 %v1538
    %v1704 = vunpack.c.l.b16 %v1539
    %v1705 = vunpack.c.h.b16 %v1539
    %v1706 = vunpack.c.l.b16 %v1540
    %v1707 = vunpack.c.h.b16 %v1540
    %v1708 = vunpack.c.l.b16 %v1541
    %v1709 = vunpack.c.h.b16 %v1541
    %v1710 = vunpack.c.l.b16 %v1542
    %v1711 = vunpack.c.h.b16 %v1542
    %v1712 = vunpack.c.l.b16 %v1543
    %v1713 = vunpack.c.h.b16 %v1543
    %v1714 = vunpack.c.l.b16 %v1544
    %v1715 = vunpack.c.h.b16 %v1544
    %v1716 = vunpack.c.l.b16 %v1545
    %v1717 = vunpack.c.h.b16 %v1545
    %v1718 = vunpack.c.l.b16 %v1546
    %v1719 = vunpack.c.h.b16 %v1546
    %v1720 = vunpack.c.l.b16 %v1547
    %v1721 = vunpack.c.h.b16 %v1547
    %v1722 = vunpack.c.l.b16 %v1548
    %v1723 = vunpack.c.h.b16 %v1548
    %v1724 = vunpack.c.l.b16 %v1549
    %v1725 = vunpack.c.h.b16 %v1549
    %v1726 = vunpack.c.l.b16 %v1550
    %v1727 = vunpack.c.h.b16 %v1550
    %v1728 = vunpack.c.l.b16 %v1551
    %v1729 = vunpack.c.h.b16 %v1551
    %v1730 = vunpack.c.l.b16 %v1552
    %v1731 = vunpack.c.h.b16 %v1552
    %v1732 = vunpack.c.l.b16 %v1553
    %v1733 = vunpack.c.h.b16 %v1553
    %v1734 = vunpack.c.l.b16 %v1554
    %v1735 = vunpack.c.h.b16 %v1554
    %v1736 = vunpack.c.l.b16 %v1555
    %v1737 = vunpack.c.h.b16 %v1555
    %v1738 = vunpack.c.l.b16 %v1556
    %v1739 = vunpack.c.h.b16 %v1556
    %v1740 = vunpack.c.l.b16 %v1557
    %v1741 = vunpack.c.h.b16 %v1557
    %v1742 = vunpack.c.l.b16 %v1558
    %v1743 = vunpack.c.h.b16 %v1558
    %v1744 = vunpack.c.l.b16 %v1559
    %v1745 = vunpack.c.h.b16 %v1559
    %v1746 = vunpack.c.l.b16 %v1560
    %v1747 = vunpack.c.h.b16 %v1560
    %v1748 = vunpack.c.l.b16 %v1561
    %v1749 = vunpack.c.h.b16 %v1561
    %v1750 = vunpack.c.l.b16 %v1562
    %v1751 = vunpack.c.h.b16 %v1562
    %v1752 = vunpack.c.l.b16 %v1563
    %v1753 = vunpack.c.h.b16 %v1563
    %v1754 = vunpack.c.l.b16 %v1564
    %v1755 = vunpack.c.h.b16 %v1564
    %v1756 = vunpack.c.l.b16 %v1565
    %v1757 = vunpack.c.h.b16 %v1565
    %v1758 = vunpack.c.l.b16 %v1566
    %v1759 = vunpack.c.h.b16 %v1566
    %v1760 = vunpack.c.l.b16 %v1567
    %v1761 = vunpack.c.h.b16 %v1567
    %v1762 = vunpack.c.l.b16 %v1568
    %v1763 = vunpack.c.h.b16 %v1568
    %v1764 = vunpack.c.l.b16 %v1569
    %v1765 = vunpack.c.h.b16 %v1569
    %v1766 = vunpack.c.l.b16 %v1570
    %v1767 = vunpack.c.h.b16 %v1570
    %v1768 = vunpack.c.l.b16 %v1571
    %v1769 = vunpack.c.h.b16 %v1571
    %v1770 = vunpack.c.l.b16 %v1572
    %v1771 = vunpack.c.h.b16 %v1572
    %v1772 = vunpack.c.l.b16 %v1573
    %v1773 = vunpack.c.h.b16 %v1573
    %v1774 = vunpack.c.l.b16 %v1574
    %v1775 = vunpack.c.h.b16 %v1574
    %v1776 = vunpack.c.l.b16 %v1575
    %v1777 = vunpack.c.h.b16 %v1575
    %v1778 = vunpack.c.l.b16 %v1576
    %v1779 = vunpack.c.h.b16 %v1576
    %v1780 = vunpack.c.l.b16 %v1577
    %v1781 = vunpack.c.h.b16 %v1577
    %v1782 = vunpack.c.l.b16 %v1578
    %v1783 = vunpack.c.h.b16 %v1578
    %v1784 = vunpack.c.l.b16 %v1579
    %v1785 = vunpack.c.h.b16 %v1579
    %v1786 = vunpack.c.l.b16 %v1580
    %v1787 = vunpack.c.h.b16 %v1580
    %v1788 = vunpack.c.l.b16 %v1581
    %v1789 = vunpack.c.h.b16 %v1581
    %v1790 = vunpack.c.l.b16 %v1582
    %v1791 = vunpack.c.h.b16 %v1582
    %v1792 = vunpack.c.l.b16 %v1583
    %v1793 = vunpack.c.h.b16 %v1583
    %v1794 = vpack.c.b16 %v1674, %v1666
    %v1795 = vpack.c.b16 %v1675, %v1667
    %v1796 = vpack.c.b16 %v1676, %v1668
    %v1797 = vpack.c.b16 %v1677, %v1669
    %v1798 = vpack.c.b16 %v1678, %v1670
    %v1799 = vpack.c.b16 %v1679, %v1671
    %v1800 = vpack.c.b16 %v1680, %v1672
    %v1801 = vpack.c.b16 %v1681, %v1673
    %v1802 = vpack.c.b16 %v1690, %v1682
    %v1803 = vpack.c.b16 %v1691, %v1683
    %v1804 = vpack.c.b16 %v1692, %v1684
    %v1805 = vpack.c.b16 %v1693, %v1685
    %v1806 = vpack.c.b16 %v1694, %v1686
    %v1807 = vpack.c.b16 %v1695, %v1687
    %v1808 = vpack.c.b16 %v1696, %v1688
    %v1809 = vpack.c.b16 %v1697, %v1689
    %v1810 = vpack.c.b16 %v1706, %v1698
    %v1811 = vpack.c.b16 %v1707, %v1699
    %v1812 = vpack.c.b16 %v1708, %v1700
    %v1813 = vpack.c.b16 %v1709, %v1701
    %v1814 = vpack.c.b16 %v1710, %v1702
    %v1815 = vpack.c.b16 %v1711, %v1703
    %v1816 = vpack.c.b16 %v1712, %v1704
    %v1817 = vpack.c.b16 %v1713, %v1705
    %v1818 = vpack.c.b16 %v1722, %v1714
    %v1819 = vpack.c.b16 %v1723, %v1715
    %v1820 = vpack.c.b16 %v1724, %v1716
    %v1821 = vpack.c.b16 %v1725, %v1717
    %v1822 = vpack.c.b16 %v1726, %v1718
    %v1823 = vpack.c.b16 %v1727, %v1719
    %v1824 = vpack.c.b16 %v1728, %v1720
    %v1825 = vpack.c.b16 %v1729, %v1721
    %v1826 = vpack.c.b16 %v1738, %v1730
    %v1827 = vpack.c.b16 %v1739, %v1731
    %v1828 = vpack.c.b16 %v1740, %v1732
    %v1829 = vpack.c.b16 %v1741, %v1733
    %v1830 = vpack.c.b16 %v1742, %v1734
    %v1831 = vpack.c.b16 %v1743, %v1735
    %v1832 = vpack.c.b16 %v1744, %v1736
    %v1833 = vpack.c.b16 %v1745, %v1737
    %v1834 = vpack.c.b16 %v1754, %v1746
    %v1835 = vpack.c.b16 %v1755, %v1747
    %v1836 = vpack.c.b16 %v1756, %v1748
    %v1837 = vpack.c.b16 %v1757, %v1749
    %v1838 = vpack.c.b16 %v1758, %v1750
    %v1839 = vpack.c.b16 %v1759, %v1751
    %v1840 = vpack.c.b16 %v1760, %v1752
    %v1841 = vpack.c.b16 %v1761, %v1753
    %v1842 = vpack.c.b16 %v1770, %v1762
    %v1843 = vpack.c.b16 %v1771, %v1763
    %v1844 = vpack.c.b16 %v1772, %v1764
    %v1845 = vpack.c.b16 %v1773, %v1765
    %v1846 = vpack.c.b16 %v1774, %v1766
    %v1847 = vpack.c.b16 %v1775, %v1767
    %v1848 = vpack.c.b16 %v1776, %v1768
    %v1849 = vpack.c.b16 %v1777, %v1769
    %v1850 = vpack.c.b16 %v1786, %v1778
    %v1851 = vpack.c.b16 %v1787, %v1779
    %v1852 = vpack.c.b16 %v1788, %v1780
    %v1853 = vpack.c.b16 %v1789, %v1781
    %v1854 = vpack.c.b16 %v1790, %v1782
    %v1855 = vpack.c.b16 %v1791, %v1783
    %v1856 = vpack.c.b16 %v1792, %v1784
    %v1857 = vpack.c.b16 %v1793, %v1785
    %1922 = vmatpush.bf16.msra.mxu0 %v1850
    %1923 = vmatpush.bf16.msra.mxu0 %v1842
    %1924 = vmatpush.bf16.msra.mxu0 %v1834
    %1925 = vmatpush.bf16.msra.mxu0 %v1826
    %1926 = vmatpush.bf16.msra.mxu0 %v1818
    %1927 = vmatpush.bf16.msra.mxu0 %v1810
    %1928 = vmatpush.bf16.msra.mxu0 %v1802
    %1929 = vmatpush.bf16.msra.mxu0 %v1794
    %1930 = vmatmul.bf16.gmra.mxu0 %v1519
    %v1931 = vpop.f32.mrf.mxu0
    %v1932 = vadd.f32 %v1586, %v1931
    %v1933 = vpop.f32.mrf.mxu0
    %1934 = vdwg.mxu0
    %1935 = vmatpush.bf16.msra.mxu0 %v1851
    %1936 = vmatpush.bf16.msra.mxu0 %v1843
    %1937 = vmatpush.bf16.msra.mxu0 %v1835
    %1938 = vmatpush.bf16.msra.mxu0 %v1827
    %1939 = vmatpush.bf16.msra.mxu0 %v1819
    %1940 = vmatpush.bf16.msra.mxu0 %v1811
    %1941 = vmatpush.bf16.msra.mxu0 %v1803
    %1942 = vmatpush.bf16.msra.mxu0 %v1795
    %1943 = vmatmul.bf16.gmra.mxu0 %v1519
    %v1944 = vpop.f32.mrf.mxu0
    %v1945 = vadd.f32 %v1587, %v1944
    %v1946 = vpop.f32.mrf.mxu0
    %1947 = vdwg.mxu0
    %1948 = vmatpush.bf16.msra.mxu0 %v1852
    %1949 = vmatpush.bf16.msra.mxu0 %v1844
    %1950 = vmatpush.bf16.msra.mxu0 %v1836
    %1951 = vmatpush.bf16.msra.mxu0 %v1828
    %1952 = vmatpush.bf16.msra.mxu0 %v1820
    %1953 = vmatpush.bf16.msra.mxu0 %v1812
    %1954 = vmatpush.bf16.msra.mxu0 %v1804
    %1955 = vmatpush.bf16.msra.mxu0 %v1796
    %1956 = vmatmul.bf16.gmra.mxu0 %v1519
    %v1957 = vpop.f32.mrf.mxu0
    %v1958 = vadd.f32 %v1588, %v1957
    %v1959 = vpop.f32.mrf.mxu0
    %1960 = vdwg.mxu0
    %1961 = vmatpush.bf16.msra.mxu0 %v1853
    %1962 = vmatpush.bf16.msra.mxu0 %v1845
    %1963 = vmatpush.bf16.msra.mxu0 %v1837
    %1964 = vmatpush.bf16.msra.mxu0 %v1829
    %1965 = vmatpush.bf16.msra.mxu0 %v1821
    %1966 = vmatpush.bf16.msra.mxu0 %v1813
    %1967 = vmatpush.bf16.msra.mxu0 %v1805
    %1968 = vmatpush.bf16.msra.mxu0 %v1797
    %1969 = vmatmul.bf16.gmra.mxu0 %v1519
    %v1970 = vpop.f32.mrf.mxu0
    %v1971 = vadd.f32 %v1589, %v1970
    %v1972 = vpop.f32.mrf.mxu0
    %1973 = vdwg.mxu0
    %1974 = vmatpush.bf16.msra.mxu0 %v1854
    %1975 = vmatpush.bf16.msra.mxu0 %v1846
    %1976 = vmatpush.bf16.msra.mxu0 %v1838
    %1977 = vmatpush.bf16.msra.mxu0 %v1830
    %1978 = vmatpush.bf16.msra.mxu0 %v1822
    %1979 = vmatpush.bf16.msra.mxu0 %v1814
    %1980 = vmatpush.bf16.msra.mxu0 %v1806
    %1981 = vmatpush.bf16.msra.mxu0 %v1798
    %1982 = vmatmul.bf16.gmra.mxu0 %v1519
    %v1983 = vpop.f32.mrf.mxu0
    %v1984 = vadd.f32 %v1590, %v1983
    %v1985 = vpop.f32.mrf.mxu0
    %1986 = vdwg.mxu0
    %1987 = vmatpush.bf16.msra.mxu0 %v1855
    %1988 = vmatpush.bf16.msra.mxu0 %v1847
    %1989 = vmatpush.bf16.msra.mxu0 %v1839
    %1990 = vmatpush.bf16.msra.mxu0 %v1831
    %1991 = vmatpush.bf16.msra.mxu0 %v1823
    %1992 = vmatpush.bf16.msra.mxu0 %v1815
    %1993 = vmatpush.bf16.msra.mxu0 %v1807
    %1994 = vmatpush.bf16.msra.mxu0 %v1799
    %1995 = vmatmul.bf16.gmra.mxu0 %v1519
    %v1996 = vpop.f32.mrf.mxu0
    %v1997 = vadd.f32 %v1591, %v1996
    %v1998 = vpop.f32.mrf.mxu0
    %1999 = vdwg.mxu0
    %2000 = vmatpush.bf16.msra.mxu0 %v1856
    %2001 = vmatpush.bf16.msra.mxu0 %v1848
    %2002 = vmatpush.bf16.msra.mxu0 %v1840
    %2003 = vmatpush.bf16.msra.mxu0 %v1832
    %2004 = vmatpush.bf16.msra.mxu0 %v1824
    %2005 = vmatpush.bf16.msra.mxu0 %v1816
    %2006 = vmatpush.bf16.msra.mxu0 %v1808
    %2007 = vmatpush.bf16.msra.mxu0 %v1800
    %2008 = vmatmul.bf16.gmra.mxu0 %v1519
    %v2009 = vpop.f32.mrf.mxu0
    %v2010 = vadd.f32 %v1592, %v2009
    %v2011 = vpop.f32.mrf.mxu0
    %2012 = vdwg.mxu0
    %2013 = vmatpush.bf16.msra.mxu0 %v1857
    %2014 = vmatpush.bf16.msra.mxu0 %v1849
    %2015 = vmatpush.bf16.msra.mxu0 %v1841
    %2016 = vmatpush.bf16.msra.mxu0 %v1833
    %2017 = vmatpush.bf16.msra.mxu0 %v1825
    %2018 = vmatpush.bf16.msra.mxu0 %v1817
    %2019 = vmatpush.bf16.msra.mxu0 %v1809
    %2020 = vmatpush.bf16.msra.mxu0 %v1801
    %2021 = vmatmul.bf16.gmra.mxu0 %v1519
    %v2022 = vpop.f32.mrf.mxu0
    %v2023 = vadd.f32 %v1593, %v2022
    %v2024 = vpop.f32.mrf.mxu0
    %2025 = vdwg.mxu0
    %v2034 = vrot.slane %v1945, 6
    %v2035 = vrot.slane %v1958, 4
    %v2036 = vrot.slane %v1971, 2
    %v2037 = vrot.slane %v1997, 6
    %v2038 = vrot.slane %v2010, 4
    %v2039 = vrot.slane %v2023, 2
    %vm2040 = vcmask 1041408
    %v2041 = vsel %vm2040, %v1932, %v2034
    %vm2042 = vcmask 1045508
    %v2043 = vsel %vm2042, %v2035, %v2036
    %vm2044 = vcmask 1043456
    %v2045 = vsel %vm2044, %v2041, %v2043
    %v2046 = vsel %vm2040, %v1984, %v2037
    %v2047 = vsel %vm2042, %v2038, %v2039
    %v2048 = vsel %vm2044, %v2046, %v2047
    %2051 = vst [vmem:[#allocation14] sm:$0xff] %v2045
    %2052 = vst [vmem:[#allocation14 + $0x8] sm:$0xff] %v2048
    // Predicated region
    $region66: #{tpu_custom_call.1} parent=1 // pred_check
      _
    $region67: #{tpu_custom_call.1} parent=1 // pred_check_branch
      %2054 = sbr.rel (0) target = $region69
    $region68: #{tpu_custom_call.1} parent=1 // pred_region
      %2056 = vsyncadd [#allocation4], 0
      %s2058 = sshll.u32 [#allocation14], 4
      %s2059 = int_to_ptr.vmem [resolvable:$true] %s2058
      %s2060 = sshll.u32 %s9, 4
      %s2061 = int_to_ptr.hbm [resolvable:$true] %s2060
      %2063 = dma.vmem_to_hbm [thread:$0]  %s2059, 256, %s2061, [#allocation4]
    $region69: #{tpu_custom_call.1} parent=1 // pred_fallthru
      _
    // Predicated region
    $region70: #{tpu_custom_call.1} parent=1 // pred_check
      _
    $region71: #{tpu_custom_call.1} parent=1 // pred_check_branch
      %2065 = sbr.rel (0) target = $region73
    $region72: #{tpu_custom_call.1} parent=1 // pred_region
      %2067 = dma.done [#allocation4], 256
    $region73: #{tpu_custom_call.1} parent=1 // pred_fallthru
      _
    %2068 = vsyncpa [#allocation3], 1
    %2069 = vsyncpa [#allocation6], 1
    %2070 = vsyncpa [#allocation9], 1
    %2071 = vsyncpa [#allocation12], 1
    %2072 = vsyncpa [#allocation4], 1

</llo_original>
